<compile_context>
chip_gen: v6e
topology: v6e:2x2x1
jax: 0.10.0
libtpu: 0.0.40
codegen_flags: <defaults>
</compile_context>

<pallas_src>
import numpy as np
import jax
import jax.numpy as jnp
from jax.experimental import pallas as pl
from jax.experimental.pallas import tpu as pltpu


# ----------------------------------------------------------------------------
# Host-side (numpy) transform-matrix builders
# ----------------------------------------------------------------------------
def _bilinear_matrix(out_size, in_size):
    """Rows map output pixels to bilinear weights over input pixels."""
    A = np.zeros((out_size, in_size), np.float32)
    for i in range(out_size):
        src = (i + 0.5) * in_size / out_size - 0.5
        src = min(max(src, 0.0), in_size - 1.0)
        lo = int(np.floor(src))
        hi = min(lo + 1, in_size - 1)
        w = src - lo
        A[i, lo] += 1.0 - w
        A[i, hi] += w
    return A


def _center_crop_resize_matrix(size, crop):
    """CenterCrop(crop) followed by Resize(size) as a (size, size) matrix."""
    top = (size - crop) // 2
    C = np.zeros((crop, size), np.float32)
    for r in range(crop):
        C[r, top + r] = 1.0
    return (_bilinear_matrix(size, crop) @ C).astype(np.float32)


def _pad_crop_resize_matrix(size, pad, crop):
    """Pad(pad, zeros) -> center RandomCrop(crop) -> Resize(size), folded."""
    padded = size + 2 * pad
    top = (padded - crop) // 2        # deterministic pick of the RandomCrop offset
    C = np.zeros((crop, size), np.float32)
    for r in range(crop):
        src = top + r - pad           # index into the original (unpadded) image
        if 0 <= src < size:
            C[r, src] = 1.0           # out-of-range rows stay zero (= zero padding)
    return (_bilinear_matrix(size, crop) @ C).astype(np.float32)


def _gaussian_band_matrix(size, ksize, sigma):
    """1-D gaussian filtering (reflect padding) as a (size, size) band matrix."""
    r = ksize // 2
    t = np.arange(ksize, dtype=np.float64) - r
    w = np.exp(-(t * t) / (2.0 * sigma * sigma))
    w /= w.sum()
    B = np.zeros((size, size), np.float32)
    for i in range(size):
        for k in range(ksize):
            j = i + k - r
            if j < 0:
                j = -j                 # torch 'reflect' padding
            if j >= size:
                j = 2 * size - 2 - j
            B[i, j] += w[k]
    return B


def _reverse_matrix(size):
    return np.eye(size, dtype=np.float32)[::-1].copy()


def _build_matrices(H, W):
    """Fold the linear stages of the chain into two bf16 matrix pairs."""
    # Scale the 1024-pixel reference geometry (crop 950, pad 50) to actual size.
    crop_h = max(2, int(round(950.0 / 1024.0 * H)))
    crop_w = max(2, int(round(950.0 / 1024.0 * W)))
    pad_h = max(1, int(round(50.0 / 1024.0 * H)))
    pad_w = max(1, int(round(50.0 / 1024.0 * W)))

    m1h = _center_crop_resize_matrix(H, crop_h)                      # CenterCrop+Resize (H)
    m1w = _center_crop_resize_matrix(W, crop_w)                      # CenterCrop+Resize (W)
    bh = _gaussian_band_matrix(H, 9, 2.0)                            # GaussianBlur (H, k=9)
    bw = _gaussian_band_matrix(W, 5, 2.0)                            # GaussianBlur (W, k=5)
    rh = _reverse_matrix(H)                                          # 180-deg rotation (H)
    rw = _reverse_matrix(W)                                          # 180-deg rotation / hflip (W)
    m2h = _pad_crop_resize_matrix(H, pad_h, min(H + pad_h, crop_h))  # Pad+Crop+Resize (H)
    m2w = _pad_crop_resize_matrix(W, pad_w, min(W + pad_w, crop_w))  # Pad+Crop+Resize (W)

    # Stage 1: CenterCrop+Resize (a nonlinear brightness clip follows it, so it
    # cannot be folded further).
    a1h = m1h
    a1w = m1w
    # Stage 2: GaussianBlur -> rot180 -> Pad+Crop+Resize, plus the final
    # RandomHorizontalFlip folded into the W operator (the flip commutes with
    # the elementwise / flip-equivariant steps 6-10 that sit in between).
    a2h = m2h @ rh @ bh
    a2w = rw @ m2w @ rw @ bw

    # W-side matrices are passed pre-transposed so the kernel never transposes.
    mats = [a1h, a1w.T.copy(), a2h, a2w.T.copy()]
    return [jnp.asarray(m, jnp.bfloat16) for m in mats]


# ----------------------------------------------------------------------------
# Pallas kernel: full augmentation chain on a block of P (H, W) planes
# ----------------------------------------------------------------------------
def _make_augment_kernel(P, H, W):
    f32 = jnp.float32
    bf16 = jnp.bfloat16
    PH = P * H

    def kernel(x_ref, a1h_ref, a1wt_ref, a2h_ref, a2wt_ref, out_ref):
        x = x_ref[...]                                    # (P, H, W) bf16
        a1wt = a1wt_ref[...]                              # (W, W) bf16 = A1w^T
        a2wt = a2wt_ref[...]                              # (W, W) bf16 = A2w^T
        # H-side matrices broadcast once over the plane batch -> batched MXU
        # matmuls over P, no in-kernel transposes / lane-changing reshapes.
        a1h_b = jnp.broadcast_to(a1h_ref[...][None], (P, H, H))
        a2h_b = jnp.broadcast_to(a2h_ref[...][None], (P, H, H))

        # ---- 1) CenterCrop + Resize (bilinear), folded ----------------------
        # W-side: ONE (P*H, W) @ (W, W) matmul (M = P*H keeps the MXU full).
        t = jnp.dot(x.reshape(PH, W), a1wt, preferred_element_type=f32)
        t = t.reshape(P, H, W).astype(bf16)
        # H-side: batched over planes ('pik,pkw->piw' == A1h @ x_p per plane).
        y = jnp.einsum('pik,pkw->piw', a1h_b, t, preferred_element_type=f32)

        # ---- 2) ColorJitter: brightness factor fixed at 1.25 (of [0.5,1.5]) -
        # TODO(synk): ColorJitter hue/saturation (RGB<->HSV) not implemented.
        y = jnp.clip(y * 1.25, 0.0, 1.0)

        # ---- 3-5 + 11) GaussianBlur -> rot180 -> Pad+Crop+Resize -> HFlip ---
        # all folded on the host into the A2h / A2w^T pair.
        # TODO(synk): RandomPerspective / RandomAffine warps not implemented.
        y = jnp.einsum('pik,pkw->piw', a2h_b, y.astype(bf16),
                       preferred_element_type=f32)
        y = jnp.dot(y.reshape(PH, W).astype(bf16), a2wt,
                    preferred_element_type=f32)           # (P*H, W) f32

        # ---- 6-8) Pointwise chain on the whole slab -------------------------
        # RandomInvert (float bound 1.0).
        y = 1.0 - y
        # RandomPosterize(bits=2) on the 0..255 scale, double floor fused:
        # floor(floor(255*v)/64)*64/255 == floor(v*255/64)*64/255.
        y = jnp.floor(jnp.clip(y, 0.0, 1.0) * (255.0 / 64.0)) * (64.0 / 255.0)
        # RandomSolarize(threshold=192) rescaled to float range.
        y = jnp.where(y >= 192.0 / 255.0, 1.0 - y, y)

        # ---- 9) RandomAdjustSharpness(2): 3x3 box stencil via XLU rolls -----
        # Rolls wrap across plane boundaries / image borders, but only border
        # pixels are affected and the interior mask restores them (torchvision
        # also leaves the 1-pixel border un-sharpened).
        ri = jax.lax.broadcasted_iota(jnp.int32, (P, H, W), 1).reshape(PH, W)
        ci = jax.lax.broadcasted_iota(jnp.int32, (PH, W), 1)
        interior = (ri > 0) & (ri < H - 1) & (ci > 0) & (ci < W - 1)
        t2 = y + pltpu.roll(y, 1, 0) + pltpu.roll(y, PH - 1, 0)
        box = t2 + pltpu.roll(t2, 1, 1) + pltpu.roll(t2, W - 1, 1)
        blur = (box + 4.0 * y) * (1.0 / 13.0)              # [[1,1,1],[1,5,1],[1,1,1]]/13
        sharp = jnp.clip(2.0 * y - blur, 0.0, 1.0)
        y = jnp.where(interior, sharp, y)

        # ---- 10) RandomAutocontrast: per-plane min/max rescale --------------
        # TODO(synk): RandomEqualize (uint8 histogram equalization) not implemented.
        y3 = y.reshape(P, H, W)
        mn = jnp.min(jnp.min(y3, axis=2, keepdims=True), axis=1, keepdims=True)
        mx = jnp.max(jnp.max(y3, axis=2, keepdims=True), axis=1, keepdims=True)
        scale = pl.reciprocal(jnp.maximum(mx - mn, 1e-12), approx=True)
        y3 = jnp.where(mx > mn, jnp.clip((y3 - mn) * scale, 0.0, 1.0), y3)

        # ---- 12) vertical_flip=False -> IdentityTransform -------------------
        # One store of the whole block.  (For W < 128 this is a masked vst; a
        # lane-dense (H, P*W) store would need an in-kernel minor transpose --
        # real image widths are 128-multiples, so the natural layout is kept.)
        out_ref[...] = y3.astype(out_ref.dtype)

    return kernel


# ----------------------------------------------------------------------------
# Wrapper
# ----------------------------------------------------------------------------
def _vmem_limit_bytes():
    """3/4 of physical VMEM: 48 MiB on v7x (64 MiB/TC), 96 MiB on v5e/v6e (128 MiB)."""
    try:
        cap = int(pltpu.get_tpu_info().vmem_capacity_bytes)
    except Exception:
        cap = 64 * 1024 * 1024          # conservative (v7x) if the query fails
    return (3 * cap) // 4


def _choose_plane_block(nc, H, W, vmem_limit, const_bytes):
    """Largest divisor of nc fitting the VMEM budget, capped at nc//2 so the
    'parallel' grid axis has >= 2 steps (keeps both v7x TensorCores busy; on
    single-core v5e/v6e the extra grid step costs only ~0.35 us)."""
    headroom = 8 * 1024 * 1024
    per_plane = (H * W * (2 * 2          # input block, bf16, double-buffered
                          + 4 * 2        # output block, f32, double-buffered
                          + 4 * 6)       # live f32 temporaries during compute
                 + H * H * 2 * 2)        # broadcast copies of the two H-matrices
    budget = max(vmem_limit - const_bytes - headroom, per_plane)
    cap = max(1, budget // per_plane)
    if nc >= 2:
        cap = min(cap, max(1, nc // 2))  # >= 2 grid steps
    best = 1
    for d in range(1, nc + 1):
        if nc % d == 0 and d <= cap:
            best = d
    return best


def _augment_one(image):
    """image: (N, C, H, W) float32 in [0, 1]."""
    N, C, H, W = image.shape
    mats = _build_matrices(H, W)
    const_bytes = sum(int(np.prod(m.shape)) * 2 for m in mats)
    nc = N * C
    vmem_limit = int(_vmem_limit_bytes())
    P = _choose_plane_block(nc, H, W, vmem_limit, const_bytes)
    # bf16 planes: stage 1 truncates to bf16 before the first matmul anyway,
    # and this halves the input HBM->VMEM DMA bytes and block VMEM footprint.
    planes = image.reshape(nc, H, W).astype(jnp.bfloat16)

    def build(single_buffer_consts):
        mat_kwargs = {}
        if single_buffer_consts:
            # Grid-invariant matrices: one VMEM copy instead of a double buffer.
            mat_kwargs = {"pipeline_mode": pl.Buffered(1)}
        in_specs = [pl.BlockSpec((P, H, W), lambda i: (i, 0, 0))]
        for m in mats:
            in_specs.append(pl.BlockSpec(m.shape, lambda i: (0, 0), **mat_kwargs))
        return pl.pallas_call(
            _make_augment_kernel(P, H, W),
            out_shape=jax.ShapeDtypeStruct((nc, H, W), jnp.float32),
            grid_spec=pltpu.PrefetchScalarGridSpec(
                num_scalar_prefetch=0,
                grid=(nc // P,),
                in_specs=in_specs,
                out_specs=pl.BlockSpec((P, H, W), lambda i: (i, 0, 0)),
            ),
            compiler_params=pltpu.CompilerParams(
                dimension_semantics=("parallel",),
                vmem_limit_bytes=vmem_limit,
            ),
        )

    try:
        out = build(True)(planes, *mats)
    except Exception:
        # Fallback for lowerings without pipeline_mode support on BlockSpec;
        # only costs one extra VMEM copy of each constant matrix.
        out = build(False)(planes, *mats)
    return out.reshape(N, C, H, W)


def augment_forward(image1, image2, p, key):
    """Equivalent of Augment.forward(image1, image2, p): RandomApply of the whole
    transform chain with probability p, independently per image."""
    k1, k2 = jax.random.split(key)
    aug1 = _augment_one(image1)
    aug2 = _augment_one(image2)
    apply1 = jax.random.uniform(k1) < p
    apply2 = jax.random.uniform(k2) < p
    out1 = jnp.where(apply1, aug1, image1)
    out2 = jnp.where(apply2, aug2, image2)
    return out1, out2


if __name__ == "__main__":
    key = jax.random.PRNGKey(0)
    k_img1, k_img2, k_apply = jax.random.split(key, 3)

    N, C, H, W = 2, 3, 16, 16                      # NCHW, small RGB images in [0,1]
    image1 = jax.random.uniform(k_img1, (N, C, H, W), jnp.float32)
    image2 = jax.random.uniform(k_img2, (N, C, H, W), jnp.float32)
    p = jnp.float32(0.9)

    out1, out2 = augment_forward(image1, image2, p, k_apply)
    jax.block_until_ready((out1, out2))

    assert out1.shape == image1.shape and out2.shape == image2.shape
    assert out1.dtype == jnp.float32 and out2.dtype == jnp.float32
    assert bool(jnp.all(jnp.isfinite(out1))) and bool(jnp.all(jnp.isfinite(out2)))
    print("KERNEL_OK")
</pallas_src>

<mosaic_0001>
module attributes {stable_mosaic.version = 11 : i64} {
  func.func @kernel(%arg0: i32, %arg1: memref<3x16x16xbf16, #tpu.memory_space<vmem>>, %arg2: memref<16x16xbf16, #tpu.memory_space<vmem>>, %arg3: memref<16x16xbf16, #tpu.memory_space<vmem>>, %arg4: memref<16x16xbf16, #tpu.memory_space<vmem>>, %arg5: memref<16x16xbf16, #tpu.memory_space<vmem>>, %arg6: memref<3x16x16xf32, #tpu.memory_space<vmem>>) attributes {dimension_semantics = [#tpu.dimension_semantics<parallel>], iteration_bounds = array<i64: 2>, scalar_prefetch = 0 : i64, scratch_operands = 0 : i64, tpu.core_type = #tpu.core_type<tc>, window_params = [{transform_indices = @transform_0, window_bounds = array<i64: 3, 16, 16>}, {pipeline_mode = #tpu.pipeline_mode<synchronous>, transform_indices = @transform_1, window_bounds = array<i64: 16, 16>}, {pipeline_mode = #tpu.pipeline_mode<synchronous>, transform_indices = @transform_2, window_bounds = array<i64: 16, 16>}, {pipeline_mode = #tpu.pipeline_mode<synchronous>, transform_indices = @transform_3, window_bounds = array<i64: 16, 16>}, {pipeline_mode = #tpu.pipeline_mode<synchronous>, transform_indices = @transform_4, window_bounds = array<i64: 16, 16>}, {transform_indices = @transform_5, window_bounds = array<i64: 3, 16, 16>}]} {
    %c0 = arith.constant 0 : index
    %c0_0 = arith.constant 0 : index
    %c0_1 = arith.constant 0 : index
    %0 = vector.load %arg1[%c0, %c0_0, %c0_1] : memref<3x16x16xbf16, #tpu.memory_space<vmem>>, vector<3x16x16xbf16>
    %c0_2 = arith.constant 0 : index
    %c0_3 = arith.constant 0 : index
    %1 = vector.load %arg3[%c0_2, %c0_3] : memref<16x16xbf16, #tpu.memory_space<vmem>>, vector<16x16xbf16>
    %c0_4 = arith.constant 0 : index
    %c0_5 = arith.constant 0 : index
    %2 = vector.load %arg5[%c0_4, %c0_5] : memref<16x16xbf16, #tpu.memory_space<vmem>>, vector<16x16xbf16>
    %c0_6 = arith.constant 0 : index
    %c0_7 = arith.constant 0 : index
    %3 = vector.load %arg2[%c0_6, %c0_7] : memref<16x16xbf16, #tpu.memory_space<vmem>>, vector<16x16xbf16>
    %4 = vector.shape_cast %3 : vector<16x16xbf16> to vector<1x16x16xbf16>
    %5 = vector.shape_cast %4 : vector<1x16x16xbf16> to vector<1x16x16xbf16>
    %6 = vector.broadcast %5 : vector<1x16x16xbf16> to vector<3x16x16xbf16>
    %c0_8 = arith.constant 0 : index
    %c0_9 = arith.constant 0 : index
    %7 = vector.load %arg4[%c0_8, %c0_9] : memref<16x16xbf16, #tpu.memory_space<vmem>>, vector<16x16xbf16>
    %8 = vector.shape_cast %7 : vector<16x16xbf16> to vector<1x16x16xbf16>
    %9 = vector.shape_cast %8 : vector<1x16x16xbf16> to vector<1x16x16xbf16>
    %10 = vector.broadcast %9 : vector<1x16x16xbf16> to vector<3x16x16xbf16>
    %11 = vector.shape_cast %0 : vector<3x16x16xbf16> to vector<48x16xbf16>
    %cst = arith.constant dense<0.000000e+00> : vector<48x16xf32>
    %12 = tpu.matmul %11, %1, %cst {dimension_numbers = #tpu.dot_dimension_numbers<[1], [0], [0], [1], [0, 0, 1, 1], [], []>} : vector<48x16xbf16>, vector<16x16xbf16>, vector<48x16xf32> -> vector<48x16xf32>
    %13 = vector.shape_cast %12 : vector<48x16xf32> to vector<3x16x16xf32>
    %14 = arith.truncf %13 : vector<3x16x16xf32> to vector<3x16x16xbf16>
    "tpu.trace_start"() <{level = 10 : i32, message = "pik,pkw->piw"}> : () -> ()
    %cst_10 = arith.constant dense<0.000000e+00> : vector<3x16x16xf32>
    %15 = tpu.matmul %6, %14, %cst_10 {dimension_numbers = #tpu.dot_dimension_numbers<[2], [1], [1], [2], [0, 0, 0, 1, 1, 2], [0], [0]>} : vector<3x16x16xbf16>, vector<3x16x16xbf16>, vector<3x16x16xf32> -> vector<3x16x16xf32>
    "tpu.trace_stop"() : () -> ()
    %cst_11 = arith.constant 1.250000e+00 : f32
    %16 = vector.broadcast %cst_11 : f32 to vector<3x16x16xf32>
    %17 = arith.mulf %15, %16 : vector<3x16x16xf32>
    %cst_12 = arith.constant 0.000000e+00 : f32
    %cst_13 = arith.constant 1.000000e+00 : f32
    %18 = vector.broadcast %cst_12 : f32 to vector<3x16x16xf32>
    %19 = arith.maximumf %18, %17 : vector<3x16x16xf32>
    %20 = vector.broadcast %cst_13 : f32 to vector<3x16x16xf32>
    %21 = arith.minimumf %20, %19 : vector<3x16x16xf32>
    %22 = arith.truncf %21 : vector<3x16x16xf32> to vector<3x16x16xbf16>
    "tpu.trace_start"() <{level = 10 : i32, message = "pik,pkw->piw"}> : () -> ()
    %cst_14 = arith.constant dense<0.000000e+00> : vector<3x16x16xf32>
    %23 = tpu.matmul %10, %22, %cst_14 {dimension_numbers = #tpu.dot_dimension_numbers<[2], [1], [1], [2], [0, 0, 0, 1, 1, 2], [0], [0]>} : vector<3x16x16xbf16>, vector<3x16x16xbf16>, vector<3x16x16xf32> -> vector<3x16x16xf32>
    "tpu.trace_stop"() : () -> ()
    %24 = vector.shape_cast %23 : vector<3x16x16xf32> to vector<48x16xf32>
    %25 = arith.truncf %24 : vector<48x16xf32> to vector<48x16xbf16>
    %cst_15 = arith.constant dense<0.000000e+00> : vector<48x16xf32>
    %26 = tpu.matmul %25, %2, %cst_15 {dimension_numbers = #tpu.dot_dimension_numbers<[1], [0], [0], [1], [0, 0, 1, 1], [], []>} : vector<48x16xbf16>, vector<16x16xbf16>, vector<48x16xf32> -> vector<48x16xf32>
    %cst_16 = arith.constant 1.000000e+00 : f32
    %27 = vector.broadcast %cst_16 : f32 to vector<48x16xf32>
    %28 = arith.subf %27, %26 : vector<48x16xf32>
    %cst_17 = arith.constant 0.000000e+00 : f32
    %cst_18 = arith.constant 1.000000e+00 : f32
    %29 = vector.broadcast %cst_17 : f32 to vector<48x16xf32>
    %30 = arith.maximumf %29, %28 : vector<48x16xf32>
    %31 = vector.broadcast %cst_18 : f32 to vector<48x16xf32>
    %32 = arith.minimumf %31, %30 : vector<48x16xf32>
    %cst_19 = arith.constant 3.984375 : f32
    %33 = vector.broadcast %cst_19 : f32 to vector<48x16xf32>
    %34 = arith.mulf %32, %33 : vector<48x16xf32>
    %35 = math.floor %34 : vector<48x16xf32>
    %cst_20 = arith.constant 0.250980407 : f32
    %36 = vector.broadcast %cst_20 : f32 to vector<48x16xf32>
    %37 = arith.mulf %35, %36 : vector<48x16xf32>
    %cst_21 = arith.constant 0.752941191 : f32
    %38 = vector.broadcast %cst_21 : f32 to vector<48x16xf32>
    %39 = arith.cmpf oge, %37, %38 : vector<48x16xf32>
    %cst_22 = arith.constant 1.000000e+00 : f32
    %40 = vector.broadcast %cst_22 : f32 to vector<48x16xf32>
    %41 = arith.subf %40, %37 : vector<48x16xf32>
    %42 = arith.select %39, %41, %37 : vector<48x16xi1>, vector<48x16xf32>
    %43 = tpu.iota {dimensions = array<i32: 1>} : vector<3x16x16xi32>
    %44 = vector.shape_cast %43 : vector<3x16x16xi32> to vector<48x16xi32>
    %45 = tpu.iota {dimensions = array<i32: 1>} : vector<48x16xi32>
    %c0_i32 = arith.constant 0 : i32
    %46 = vector.broadcast %c0_i32 : i32 to vector<48x16xi32>
    %47 = arith.cmpi sgt, %44, %46 : vector<48x16xi32>
    %c15_i32 = arith.constant 15 : i32
    %48 = vector.broadcast %c15_i32 : i32 to vector<48x16xi32>
    %49 = arith.cmpi slt, %44, %48 : vector<48x16xi32>
    %50 = arith.andi %47, %49 : vector<48x16xi1>
    %c0_i32_23 = arith.constant 0 : i32
    %51 = vector.broadcast %c0_i32_23 : i32 to vector<48x16xi32>
    %52 = arith.cmpi sgt, %45, %51 : vector<48x16xi32>
    %53 = arith.andi %50, %52 : vector<48x16xi1>
    %c15_i32_24 = arith.constant 15 : i32
    %54 = vector.broadcast %c15_i32_24 : i32 to vector<48x16xi32>
    %55 = arith.cmpi slt, %45, %54 : vector<48x16xi32>
    %56 = arith.andi %53, %55 : vector<48x16xi1>
    %c1_i32 = arith.constant 1 : i32
    %57 = tpu.dynamic_rotate %42 by %c1_i32 dim 0 : vector<48x16xf32>, i32 -> vector<48x16xf32>
    %58 = arith.addf %42, %57 : vector<48x16xf32>
    %c47_i32 = arith.constant 47 : i32
    %59 = tpu.dynamic_rotate %42 by %c47_i32 dim 0 : vector<48x16xf32>, i32 -> vector<48x16xf32>
    %60 = arith.addf %58, %59 : vector<48x16xf32>
    %c1_i32_25 = arith.constant 1 : i32
    %61 = tpu.dynamic_rotate %60 by %c1_i32_25 dim 1 : vector<48x16xf32>, i32 -> vector<48x16xf32>
    %62 = arith.addf %60, %61 : vector<48x16xf32>
    %c15_i32_26 = arith.constant 15 : i32
    %63 = tpu.dynamic_rotate %60 by %c15_i32_26 dim 1 : vector<48x16xf32>, i32 -> vector<48x16xf32>
    %64 = arith.addf %62, %63 : vector<48x16xf32>
    %cst_27 = arith.constant 4.000000e+00 : f32
    %65 = vector.broadcast %cst_27 : f32 to vector<48x16xf32>
    %66 = arith.mulf %65, %42 : vector<48x16xf32>
    %67 = arith.addf %64, %66 : vector<48x16xf32>
    %cst_28 = arith.constant 0.0769230798 : f32
    %68 = vector.broadcast %cst_28 : f32 to vector<48x16xf32>
    %69 = arith.mulf %67, %68 : vector<48x16xf32>
    %cst_29 = arith.constant 2.000000e+00 : f32
    %70 = vector.broadcast %cst_29 : f32 to vector<48x16xf32>
    %71 = arith.mulf %70, %42 : vector<48x16xf32>
    %72 = arith.subf %71, %69 : vector<48x16xf32>
    %cst_30 = arith.constant 0.000000e+00 : f32
    %cst_31 = arith.constant 1.000000e+00 : f32
    %73 = vector.broadcast %cst_30 : f32 to vector<48x16xf32>
    %74 = arith.maximumf %73, %72 : vector<48x16xf32>
    %75 = vector.broadcast %cst_31 : f32 to vector<48x16xf32>
    %76 = arith.minimumf %75, %74 : vector<48x16xf32>
    %77 = arith.select %56, %76, %42 : vector<48x16xi1>, vector<48x16xf32>
    %78 = vector.shape_cast %77 : vector<48x16xf32> to vector<3x16x16xf32>
    %cst_32 = arith.constant dense<0x7F800000> : vector<3x16xf32>
    %79 = vector.multi_reduction <minimumf>, %78, %cst_32 [2] : vector<3x16x16xf32> to vector<3x16xf32>
    %80 = vector.shape_cast %79 : vector<3x16xf32> to vector<3x16x1xf32>
    %cst_33 = arith.constant dense<0x7F800000> : vector<3x1xf32>
    %81 = vector.multi_reduction <minimumf>, %80, %cst_33 [1] : vector<3x16x1xf32> to vector<3x1xf32>
    %82 = vector.shape_cast %81 : vector<3x1xf32> to vector<3x1x1xf32>
    %cst_34 = arith.constant dense<0xFF800000> : vector<3x16xf32>
    %83 = vector.multi_reduction <maximumf>, %78, %cst_34 [2] : vector<3x16x16xf32> to vector<3x16xf32>
    %84 = vector.shape_cast %83 : vector<3x16xf32> to vector<3x16x1xf32>
    %cst_35 = arith.constant dense<0xFF800000> : vector<3x1xf32>
    %85 = vector.multi_reduction <maximumf>, %84, %cst_35 [1] : vector<3x16x1xf32> to vector<3x1xf32>
    %86 = vector.shape_cast %85 : vector<3x1xf32> to vector<3x1x1xf32>
    %87 = arith.subf %86, %82 : vector<3x1x1xf32>
    %cst_36 = arith.constant 9.99999996E-13 : f32
    %88 = vector.broadcast %cst_36 : f32 to vector<3x1x1xf32>
    %89 = arith.maximumf %87, %88 : vector<3x1x1xf32>
    %90 = tpu.reciprocal %89 {approx = true} : vector<3x1x1xf32> -> vector<3x1x1xf32>
    %91 = arith.cmpf ogt, %86, %82 : vector<3x1x1xf32>
    %92 = vector.broadcast %82 : vector<3x1x1xf32> to vector<3x16x16xf32>
    %93 = arith.subf %78, %92 : vector<3x16x16xf32>
    %94 = vector.broadcast %90 : vector<3x1x1xf32> to vector<3x16x16xf32>
    %95 = arith.mulf %93, %94 : vector<3x16x16xf32>
    %cst_37 = arith.constant 0.000000e+00 : f32
    %cst_38 = arith.constant 1.000000e+00 : f32
    %96 = vector.broadcast %cst_37 : f32 to vector<3x16x16xf32>
    %97 = arith.maximumf %96, %95 : vector<3x16x16xf32>
    %98 = vector.broadcast %cst_38 : f32 to vector<3x16x16xf32>
    %99 = arith.minimumf %98, %97 : vector<3x16x16xf32>
    %100 = vector.shape_cast %91 : vector<3x1x1xi1> to vector<3x1x1xi1>
    %101 = vector.broadcast %100 : vector<3x1x1xi1> to vector<3x16x16xi1>
    %102 = arith.select %101, %99, %78 : vector<3x16x16xi1>, vector<3x16x16xf32>
    %c0_39 = arith.constant 0 : index
    %c0_40 = arith.constant 0 : index
    %c0_41 = arith.constant 0 : index
    %103 = vector.load %arg6[%c0_39, %c0_40, %c0_41] : memref<3x16x16xf32, #tpu.memory_space<vmem>>, vector<3x16x16xf32>
    tpu.vector_store %arg6[%c0_39, %c0_40, %c0_41], %102 {strides = array<i32>} : memref<3x16x16xf32, #tpu.memory_space<vmem>>, vector<3x16x16xf32>,
    return
  }
  func.func @transform_0(%arg0: i32) -> (i32, i32, i32) {
    %c0_i32 = arith.constant 0 : i32
    %c0_i32_0 = arith.constant 0 : i32
    %c0_i32_1 = arith.constant 0 : i32
    return %arg0, %c0_i32, %c0_i32_0 : i32, i32, i32
  }
  func.func @transform_1(%arg0: i32) -> (i32, i32) {
    %c0_i32 = arith.constant 0 : i32
    %c0_i32_0 = arith.constant 0 : i32
    %c0_i32_1 = arith.constant 0 : i32
    return %c0_i32, %c0_i32_0 : i32, i32
  }
  func.func @transform_2(%arg0: i32) -> (i32, i32) {
    %c0_i32 = arith.constant 0 : i32
    %c0_i32_0 = arith.constant 0 : i32
    %c0_i32_1 = arith.constant 0 : i32
    return %c0_i32, %c0_i32_0 : i32, i32
  }
  func.func @transform_3(%arg0: i32) -> (i32, i32) {
    %c0_i32 = arith.constant 0 : i32
    %c0_i32_0 = arith.constant 0 : i32
    %c0_i32_1 = arith.constant 0 : i32
    return %c0_i32, %c0_i32_0 : i32, i32
  }
  func.func @transform_4(%arg0: i32) -> (i32, i32) {
    %c0_i32 = arith.constant 0 : i32
    %c0_i32_0 = arith.constant 0 : i32
    %c0_i32_1 = arith.constant 0 : i32
    return %c0_i32, %c0_i32_0 : i32, i32
  }
  func.func @transform_5(%arg0: i32) -> (i32, i32, i32) {
    %c0_i32 = arith.constant 0 : i32
    %c0_i32_0 = arith.constant 0 : i32
    %c0_i32_1 = arith.constant 0 : i32
    return %arg0, %c0_i32, %c0_i32_0 : i32, i32, i32
  }
}

module attributes {stable_mosaic.version = 11 : i64} {
  func.func @kernel(%arg0: i32, %arg1: memref<3x16x16xbf16, #tpu.memory_space<vmem>>, %arg2: memref<16x16xbf16, #tpu.memory_space<vmem>>, %arg3: memref<16x16xbf16, #tpu.memory_space<vmem>>, %arg4: memref<16x16xbf16, #tpu.memory_space<vmem>>, %arg5: memref<16x16xbf16, #tpu.memory_space<vmem>>, %arg6: memref<3x16x16xf32, #tpu.memory_space<vmem>>) attributes {dimension_semantics = [#tpu.dimension_semantics<parallel>], iteration_bounds = array<i64: 2>, scalar_prefetch = 0 : i64, scratch_operands = 0 : i64, tpu.core_type = #tpu.core_type<tc>, window_params = [{transform_indices = @transform_0, window_bounds = array<i64: 3, 16, 16>}, {pipeline_mode = #tpu.pipeline_mode<synchronous>, transform_indices = @transform_1, window_bounds = array<i64: 16, 16>}, {pipeline_mode = #tpu.pipeline_mode<synchronous>, transform_indices = @transform_2, window_bounds = array<i64: 16, 16>}, {pipeline_mode = #tpu.pipeline_mode<synchronous>, transform_indices = @transform_3, window_bounds = array<i64: 16, 16>}, {pipeline_mode = #tpu.pipeline_mode<synchronous>, transform_indices = @transform_4, window_bounds = array<i64: 16, 16>}, {transform_indices = @transform_5, window_bounds = array<i64: 3, 16, 16>}]} {
    %c0 = arith.constant 0 : index
    %c0_0 = arith.constant 0 : index
    %c0_1 = arith.constant 0 : index
    %0 = vector.load %arg1[%c0, %c0_0, %c0_1] : memref<3x16x16xbf16, #tpu.memory_space<vmem>>, vector<3x16x16xbf16>
    %c0_2 = arith.constant 0 : index
    %c0_3 = arith.constant 0 : index
    %1 = vector.load %arg3[%c0_2, %c0_3] : memref<16x16xbf16, #tpu.memory_space<vmem>>, vector<16x16xbf16>
    %c0_4 = arith.constant 0 : index
    %c0_5 = arith.constant 0 : index
    %2 = vector.load %arg5[%c0_4, %c0_5] : memref<16x16xbf16, #tpu.memory_space<vmem>>, vector<16x16xbf16>
    %c0_6 = arith.constant 0 : index
    %c0_7 = arith.constant 0 : index
    %3 = vector.load %arg2[%c0_6, %c0_7] : memref<16x16xbf16, #tpu.memory_space<vmem>>, vector<16x16xbf16>
    %4 = vector.shape_cast %3 : vector<16x16xbf16> to vector<1x16x16xbf16>
    %5 = vector.shape_cast %4 : vector<1x16x16xbf16> to vector<1x16x16xbf16>
    %6 = vector.broadcast %5 : vector<1x16x16xbf16> to vector<3x16x16xbf16>
    %c0_8 = arith.constant 0 : index
    %c0_9 = arith.constant 0 : index
    %7 = vector.load %arg4[%c0_8, %c0_9] : memref<16x16xbf16, #tpu.memory_space<vmem>>, vector<16x16xbf16>
    %8 = vector.shape_cast %7 : vector<16x16xbf16> to vector<1x16x16xbf16>
    %9 = vector.shape_cast %8 : vector<1x16x16xbf16> to vector<1x16x16xbf16>
    %10 = vector.broadcast %9 : vector<1x16x16xbf16> to vector<3x16x16xbf16>
    %11 = vector.shape_cast %0 : vector<3x16x16xbf16> to vector<48x16xbf16>
    %cst = arith.constant dense<0.000000e+00> : vector<48x16xf32>
    %12 = tpu.matmul %11, %1, %cst {dimension_numbers = #tpu.dot_dimension_numbers<[1], [0], [0], [1], [0, 0, 1, 1], [], []>} : vector<48x16xbf16>, vector<16x16xbf16>, vector<48x16xf32> -> vector<48x16xf32>
    %13 = vector.shape_cast %12 : vector<48x16xf32> to vector<3x16x16xf32>
    %14 = arith.truncf %13 : vector<3x16x16xf32> to vector<3x16x16xbf16>
    "tpu.trace_start"() <{level = 10 : i32, message = "pik,pkw->piw"}> : () -> ()
    %cst_10 = arith.constant dense<0.000000e+00> : vector<3x16x16xf32>
    %15 = tpu.matmul %6, %14, %cst_10 {dimension_numbers = #tpu.dot_dimension_numbers<[2], [1], [1], [2], [0, 0, 0, 1, 1, 2], [0], [0]>} : vector<3x16x16xbf16>, vector<3x16x16xbf16>, vector<3x16x16xf32> -> vector<3x16x16xf32>
    "tpu.trace_stop"() : () -> ()
    %cst_11 = arith.constant 1.250000e+00 : f32
    %16 = vector.broadcast %cst_11 : f32 to vector<3x16x16xf32>
    %17 = arith.mulf %15, %16 : vector<3x16x16xf32>
    %cst_12 = arith.constant 0.000000e+00 : f32
    %cst_13 = arith.constant 1.000000e+00 : f32
    %18 = vector.broadcast %cst_12 : f32 to vector<3x16x16xf32>
    %19 = arith.maximumf %18, %17 : vector<3x16x16xf32>
    %20 = vector.broadcast %cst_13 : f32 to vector<3x16x16xf32>
    %21 = arith.minimumf %20, %19 : vector<3x16x16xf32>
    %22 = arith.truncf %21 : vector<3x16x16xf32> to vector<3x16x16xbf16>
    "tpu.trace_start"() <{level = 10 : i32, message = "pik,pkw->piw"}> : () -> ()
    %cst_14 = arith.constant dense<0.000000e+00> : vector<3x16x16xf32>
    %23 = tpu.matmul %10, %22, %cst_14 {dimension_numbers = #tpu.dot_dimension_numbers<[2], [1], [1], [2], [0, 0, 0, 1, 1, 2], [0], [0]>} : vector<3x16x16xbf16>, vector<3x16x16xbf16>, vector<3x16x16xf32> -> vector<3x16x16xf32>
    "tpu.trace_stop"() : () -> ()
    %24 = vector.shape_cast %23 : vector<3x16x16xf32> to vector<48x16xf32>
    %25 = arith.truncf %24 : vector<48x16xf32> to vector<48x16xbf16>
    %cst_15 = arith.constant dense<0.000000e+00> : vector<48x16xf32>
    %26 = tpu.matmul %25, %2, %cst_15 {dimension_numbers = #tpu.dot_dimension_numbers<[1], [0], [0], [1], [0, 0, 1, 1], [], []>} : vector<48x16xbf16>, vector<16x16xbf16>, vector<48x16xf32> -> vector<48x16xf32>
    %cst_16 = arith.constant 1.000000e+00 : f32
    %27 = vector.broadcast %cst_16 : f32 to vector<48x16xf32>
    %28 = arith.subf %27, %26 : vector<48x16xf32>
    %cst_17 = arith.constant 0.000000e+00 : f32
    %cst_18 = arith.constant 1.000000e+00 : f32
    %29 = vector.broadcast %cst_17 : f32 to vector<48x16xf32>
    %30 = arith.maximumf %29, %28 : vector<48x16xf32>
    %31 = vector.broadcast %cst_18 : f32 to vector<48x16xf32>
    %32 = arith.minimumf %31, %30 : vector<48x16xf32>
    %cst_19 = arith.constant 3.984375 : f32
    %33 = vector.broadcast %cst_19 : f32 to vector<48x16xf32>
    %34 = arith.mulf %32, %33 : vector<48x16xf32>
    %35 = math.floor %34 : vector<48x16xf32>
    %cst_20 = arith.constant 0.250980407 : f32
    %36 = vector.broadcast %cst_20 : f32 to vector<48x16xf32>
    %37 = arith.mulf %35, %36 : vector<48x16xf32>
    %cst_21 = arith.constant 0.752941191 : f32
    %38 = vector.broadcast %cst_21 : f32 to vector<48x16xf32>
    %39 = arith.cmpf oge, %37, %38 : vector<48x16xf32>
    %cst_22 = arith.constant 1.000000e+00 : f32
    %40 = vector.broadcast %cst_22 : f32 to vector<48x16xf32>
    %41 = arith.subf %40, %37 : vector<48x16xf32>
    %42 = arith.select %39, %41, %37 : vector<48x16xi1>, vector<48x16xf32>
    %43 = tpu.iota {dimensions = array<i32: 1>} : vector<3x16x16xi32>
    %44 = vector.shape_cast %43 : vector<3x16x16xi32> to vector<48x16xi32>
    %45 = tpu.iota {dimensions = array<i32: 1>} : vector<48x16xi32>
    %c0_i32 = arith.constant 0 : i32
    %46 = vector.broadcast %c0_i32 : i32 to vector<48x16xi32>
    %47 = arith.cmpi sgt, %44, %46 : vector<48x16xi32>
    %c15_i32 = arith.constant 15 : i32
    %48 = vector.broadcast %c15_i32 : i32 to vector<48x16xi32>
    %49 = arith.cmpi slt, %44, %48 : vector<48x16xi32>
    %50 = arith.andi %47, %49 : vector<48x16xi1>
    %c0_i32_23 = arith.constant 0 : i32
    %51 = vector.broadcast %c0_i32_23 : i32 to vector<48x16xi32>
    %52 = arith.cmpi sgt, %45, %51 : vector<48x16xi32>
    %53 = arith.andi %50, %52 : vector<48x16xi1>
    %c15_i32_24 = arith.constant 15 : i32
    %54 = vector.broadcast %c15_i32_24 : i32 to vector<48x16xi32>
    %55 = arith.cmpi slt, %45, %54 : vector<48x16xi32>
    %56 = arith.andi %53, %55 : vector<48x16xi1>
    %c1_i32 = arith.constant 1 : i32
    %57 = tpu.dynamic_rotate %42 by %c1_i32 dim 0 : vector<48x16xf32>, i32 -> vector<48x16xf32>
    %58 = arith.addf %42, %57 : vector<48x16xf32>
    %c47_i32 = arith.constant 47 : i32
    %59 = tpu.dynamic_rotate %42 by %c47_i32 dim 0 : vector<48x16xf32>, i32 -> vector<48x16xf32>
    %60 = arith.addf %58, %59 : vector<48x16xf32>
    %c1_i32_25 = arith.constant 1 : i32
    %61 = tpu.dynamic_rotate %60 by %c1_i32_25 dim 1 : vector<48x16xf32>, i32 -> vector<48x16xf32>
    %62 = arith.addf %60, %61 : vector<48x16xf32>
    %c15_i32_26 = arith.constant 15 : i32
    %63 = tpu.dynamic_rotate %60 by %c15_i32_26 dim 1 : vector<48x16xf32>, i32 -> vector<48x16xf32>
    %64 = arith.addf %62, %63 : vector<48x16xf32>
    %cst_27 = arith.constant 4.000000e+00 : f32
    %65 = vector.broadcast %cst_27 : f32 to vector<48x16xf32>
    %66 = arith.mulf %65, %42 : vector<48x16xf32>
    %67 = arith.addf %64, %66 : vector<48x16xf32>
    %cst_28 = arith.constant 0.0769230798 : f32
    %68 = vector.broadcast %cst_28 : f32 to vector<48x16xf32>
    %69 = arith.mulf %67, %68 : vector<48x16xf32>
    %cst_29 = arith.constant 2.000000e+00 : f32
    %70 = vector.broadcast %cst_29 : f32 to vector<48x16xf32>
    %71 = arith.mulf %70, %42 : vector<48x16xf32>
    %72 = arith.subf %71, %69 : vector<48x16xf32>
    %cst_30 = arith.constant 0.000000e+00 : f32
    %cst_31 = arith.constant 1.000000e+00 : f32
    %73 = vector.broadcast %cst_30 : f32 to vector<48x16xf32>
    %74 = arith.maximumf %73, %72 : vector<48x16xf32>
    %75 = vector.broadcast %cst_31 : f32 to vector<48x16xf32>
    %76 = arith.minimumf %75, %74 : vector<48x16xf32>
    %77 = arith.select %56, %76, %42 : vector<48x16xi1>, vector<48x16xf32>
    %78 = vector.shape_cast %77 : vector<48x16xf32> to vector<3x16x16xf32>
    %cst_32 = arith.constant dense<0x7F800000> : vector<3x16xf32>
    %79 = vector.multi_reduction <minimumf>, %78, %cst_32 [2] : vector<3x16x16xf32> to vector<3x16xf32>
    %80 = vector.shape_cast %79 : vector<3x16xf32> to vector<3x16x1xf32>
    %cst_33 = arith.constant dense<0x7F800000> : vector<3x1xf32>
    %81 = vector.multi_reduction <minimumf>, %80, %cst_33 [1] : vector<3x16x1xf32> to vector<3x1xf32>
    %82 = vector.shape_cast %81 : vector<3x1xf32> to vector<3x1x1xf32>
    %cst_34 = arith.constant dense<0xFF800000> : vector<3x16xf32>
    %83 = vector.multi_reduction <maximumf>, %78, %cst_34 [2] : vector<3x16x16xf32> to vector<3x16xf32>
    %84 = vector.shape_cast %83 : vector<3x16xf32> to vector<3x16x1xf32>
    %cst_35 = arith.constant dense<0xFF800000> : vector<3x1xf32>
    %85 = vector.multi_reduction <maximumf>, %84, %cst_35 [1] : vector<3x16x1xf32> to vector<3x1xf32>
    %86 = vector.shape_cast %85 : vector<3x1xf32> to vector<3x1x1xf32>
    %87 = arith.subf %86, %82 : vector<3x1x1xf32>
    %cst_36 = arith.constant 9.99999996E-13 : f32
    %88 = vector.broadcast %cst_36 : f32 to vector<3x1x1xf32>
    %89 = arith.maximumf %87, %88 : vector<3x1x1xf32>
    %90 = tpu.reciprocal %89 {approx = true} : vector<3x1x1xf32> -> vector<3x1x1xf32>
    %91 = arith.cmpf ogt, %86, %82 : vector<3x1x1xf32>
    %92 = vector.broadcast %82 : vector<3x1x1xf32> to vector<3x16x16xf32>
    %93 = arith.subf %78, %92 : vector<3x16x16xf32>
    %94 = vector.broadcast %90 : vector<3x1x1xf32> to vector<3x16x16xf32>
    %95 = arith.mulf %93, %94 : vector<3x16x16xf32>
    %cst_37 = arith.constant 0.000000e+00 : f32
    %cst_38 = arith.constant 1.000000e+00 : f32
    %96 = vector.broadcast %cst_37 : f32 to vector<3x16x16xf32>
    %97 = arith.maximumf %96, %95 : vector<3x16x16xf32>
    %98 = vector.broadcast %cst_38 : f32 to vector<3x16x16xf32>
    %99 = arith.minimumf %98, %97 : vector<3x16x16xf32>
    %100 = vector.shape_cast %91 : vector<3x1x1xi1> to vector<3x1x1xi1>
    %101 = vector.broadcast %100 : vector<3x1x1xi1> to vector<3x16x16xi1>
    %102 = arith.select %101, %99, %78 : vector<3x16x16xi1>, vector<3x16x16xf32>
    %c0_39 = arith.constant 0 : index
    %c0_40 = arith.constant 0 : index
    %c0_41 = arith.constant 0 : index
    %103 = vector.load %arg6[%c0_39, %c0_40, %c0_41] : memref<3x16x16xf32, #tpu.memory_space<vmem>>, vector<3x16x16xf32>
    tpu.vector_store %arg6[%c0_39, %c0_40, %c0_41], %102 {strides = array<i32>} : memref<3x16x16xf32, #tpu.memory_space<vmem>>, vector<3x16x16xf32>,
    return
  }
  func.func @transform_0(%arg0: i32) -> (i32, i32, i32) {
    %c0_i32 = arith.constant 0 : i32
    %c0_i32_0 = arith.constant 0 : i32
    %c0_i32_1 = arith.constant 0 : i32
    return %arg0, %c0_i32, %c0_i32_0 : i32, i32, i32
  }
  func.func @transform_1(%arg0: i32) -> (i32, i32) {
    %c0_i32 = arith.constant 0 : i32
    %c0_i32_0 = arith.constant 0 : i32
    %c0_i32_1 = arith.constant 0 : i32
    return %c0_i32, %c0_i32_0 : i32, i32
  }
  func.func @transform_2(%arg0: i32) -> (i32, i32) {
    %c0_i32 = arith.constant 0 : i32
    %c0_i32_0 = arith.constant 0 : i32
    %c0_i32_1 = arith.constant 0 : i32
    return %c0_i32, %c0_i32_0 : i32, i32
  }
  func.func @transform_3(%arg0: i32) -> (i32, i32) {
    %c0_i32 = arith.constant 0 : i32
    %c0_i32_0 = arith.constant 0 : i32
    %c0_i32_1 = arith.constant 0 : i32
    return %c0_i32, %c0_i32_0 : i32, i32
  }
  func.func @transform_4(%arg0: i32) -> (i32, i32) {
    %c0_i32 = arith.constant 0 : i32
    %c0_i32_0 = arith.constant 0 : i32
    %c0_i32_1 = arith.constant 0 : i32
    return %c0_i32, %c0_i32_0 : i32, i32
  }
  func.func @transform_5(%arg0: i32) -> (i32, i32, i32) {
    %c0_i32 = arith.constant 0 : i32
    %c0_i32_0 = arith.constant 0 : i32
    %c0_i32_1 = arith.constant 0 : i32
    return %arg0, %c0_i32, %c0_i32_0 : i32, i32, i32
  }
}

</mosaic_0001>

<llo_original>
// kernel: tpu_custom_call.1
$region0: #{tpu_custom_call.1}
  #allocation0 [shape = 'u32[]', space=smem, size = 0x4, offset = 0x4, fixed_abs, tag = 'smem constant byte address 0x4 - core index']
  #allocation1 [shape = 'u32[144,128]{1,0:T(1,128)}', space=vmem, size = 0x12000, scoped, tag = 'internal scratch']
  %s0 = inlined_call_operand.hbm [shape: bf16[6,16,16], index: 0, kind: input, shape index: {}]
  %s1 = inlined_call_operand.hbm [shape: bf16[16,16], index: 1, kind: input, shape index: {}]
  %s2 = inlined_call_operand.hbm [shape: bf16[16,16], index: 2, kind: input, shape index: {}]
  %s3 = inlined_call_operand.hbm [shape: bf16[16,16], index: 3, kind: input, shape index: {}]
  %s4 = inlined_call_operand.hbm [shape: bf16[16,16], index: 4, kind: input, shape index: {}]
  %s5 = inlined_call_operand.hbm [shape: f32[6,16,16], index: 5, kind: output, shape index: {}]
  %s6 = sld [smem:[#allocation0]]
  $region73: #{tpu_custom_call.1} parent=0
    _
  %s8 = ssub.s32 1, %s6
  %s9 = scalar_select 0, %s8, %s6
  $region1: #{tpu_custom_call.1} parent=0
    #allocation2 [shape = 'u8[24576]{0}', space=vmem, size = 0x6000, scoped, tag = 'input window, operand 0']
    #allocation3 [shape = 's32[2]{0}', space=sflag, size = 0x8, scoped, tag = 'scoped memory for tpu_custom_call.1']
    #allocation4 [shape = 's32[2]{0}', space=sflag, size = 0x8, scoped, tag = 'scoped memory for tpu_custom_call.1']
    #allocation5 [shape = 'u8[4096]{0}', space=vmem, size = 0x1000, scoped, tag = 'input window, operand 1, single buffered']
    #allocation6 [shape = 's32[1]{0}', space=sflag, size = 0x4, scoped, tag = 'scoped memory for tpu_custom_call.1']
    #allocation7 [shape = 'u8[4096]{0}', space=vmem, size = 0x1000, scoped, tag = 'input window, operand 2, single buffered']
    #allocation8 [shape = 'u8[4096]{0}', space=vmem, size = 0x1000, scoped, tag = 'input window, operand 3, single buffered']
    #allocation9 [shape = 's32[1]{0}', space=sflag, size = 0x4, scoped, tag = 'scoped memory for tpu_custom_call.1']
    #allocation10 [shape = 'u8[4096]{0}', space=vmem, size = 0x1000, scoped, tag = 'input window, operand 4, single buffered']
    #allocation11 [shape = 'u8[49152]{0}', space=vmem, size = 0xc000, scoped, tag = 'output window, operand 0']
    %10 = vsyncpa [#allocation3], 0
    %s11 = scalar_lea.sflag [#allocation3], 1
    %12 = vsyncpa %s11, 0
    %13 = vsyncpa [#allocation6], 0
    %14 = vsyncpa [#allocation9], 0
    %15 = vsyncpa [#allocation4], 0
    %s16 = scalar_lea.sflag [#allocation4], 1
    %17 = vsyncpa %s16, 0
    loop: start=0, step=1, limit=4
    $region2: #{tpu_custom_call.1} parent=1 // loop_pre_header
      _
    $region3: #{tpu_custom_call.1} parent=1 // loop_header
      %s19 = sphi 0, %s23
      %p20 = scmp.ge.s32.totalorder %s19, 4
      %s29 = sphi 0, %s31
      %s32 = sphi 0, %s29
      %s33 = sphi 0, %s32
      %s49 = sphi 0, %s33
      %s53 = sphi 0, %s53
      %s55 = sphi 0, %s53
      %s56 = sphi 0, %s55
      %s70 = sphi 0, %s56
      %s74 = sphi 0, %s74
      %s76 = sphi 0, %s74
      %s77 = sphi 0, %s76
      %s91 = sphi 0, %s77
      %s95 = sphi 0, %s95
      %s97 = sphi 0, %s95
      %s98 = sphi 0, %s97
      %s112 = sphi 0, %s98
      %s116 = sphi 0, %s116
      %s118 = sphi 0, %s116
      %s119 = sphi 0, %s118
      %s133 = sphi 0, %s119
      %s139 = sphi 0, %s141
      %s142 = sphi 0, %s139
      %s143 = sphi 0, %s142
      %s159 = sphi 0, %s143
    $region4: #{tpu_custom_call.1} parent=1 // loop_header_branch
      %22 = sbr.rel (%p20) target = $region8
    $region5: #{tpu_custom_call.1} parent=1 // loop_body
      %s24 = ssub.s32 %s19, 1
      %s25 = ssub.s32 %s19, 2
      %s26 = sadd.s32 %s19, 1
      %s27 = ssub.s32 %s19, %s26
      %p28 = scmp.eq.s32.totalorder %s27, 0
      %s30 = sadd.s32 %s29, 1
      %s31 = scalar_select %p28, %s29, %s30
      %p34 = pneg %p28
      %p35 = scmp.eq.s32.totalorder %s19, 1
      %p36 = por %p34, %p35
      %p37 = scmp.ne.s32.totalorder %s29, %s32
      %p38 = scmp.eq.s32.totalorder %s19, 0
      %p39 = por %p37, %p38
      %p40 = scmp.ne.s32.totalorder %s29, %s32
      %p41 = scmp.eq.s32.totalorder %s24, 1
      %p42 = por %p40, %p41
      %p43 = scmp.ne.s32.totalorder %s32, %s33
      %p44 = scmp.eq.s32.totalorder %s24, 0
      %p45 = por %p43, %p44
      %p46 = scmp.ne.s32.totalorder %s32, %s33
      %p47 = scmp.eq.s32.totalorder %s25, 1
      %p48 = por %p46, %p47
      %p50 = scmp.ne.s32.totalorder %s33, %s49
      %p51 = scmp.eq.s32.totalorder %s25, 0
      %p52 = por %p50, %p51
      %s54 = sadd.s32 %s53, 1
      %p57 = scmp.eq.s32.totalorder %s19, 1
      %p58 = scmp.ne.s32.totalorder %s53, %s55
      %p59 = scmp.eq.s32.totalorder %s19, 0
      %p60 = por %p58, %p59
      %p61 = scmp.ne.s32.totalorder %s53, %s55
      %p62 = scmp.eq.s32.totalorder %s24, 1
      %p63 = por %p61, %p62
      %p64 = scmp.ne.s32.totalorder %s55, %s56
      %p65 = scmp.eq.s32.totalorder %s24, 0
      %p66 = por %p64, %p65
      %p67 = scmp.ne.s32.totalorder %s55, %s56
      %p68 = scmp.eq.s32.totalorder %s25, 1
      %p69 = por %p67, %p68
      %p71 = scmp.ne.s32.totalorder %s56, %s70
      %p72 = scmp.eq.s32.totalorder %s25, 0
      %p73 = por %p71, %p72
      %s75 = sadd.s32 %s74, 1
      %p78 = scmp.eq.s32.totalorder %s19, 1
      %p79 = scmp.ne.s32.totalorder %s74, %s76
      %p80 = scmp.eq.s32.totalorder %s19, 0
      %p81 = por %p79, %p80
      %p82 = scmp.ne.s32.totalorder %s74, %s76
      %p83 = scmp.eq.s32.totalorder %s24, 1
      %p84 = por %p82, %p83
      %p85 = scmp.ne.s32.totalorder %s76, %s77
      %p86 = scmp.eq.s32.totalorder %s24, 0
      %p87 = por %p85, %p86
      %p88 = scmp.ne.s32.totalorder %s76, %s77
      %p89 = scmp.eq.s32.totalorder %s25, 1
      %p90 = por %p88, %p89
      %p92 = scmp.ne.s32.totalorder %s77, %s91
      %p93 = scmp.eq.s32.totalorder %s25, 0
      %p94 = por %p92, %p93
      %s96 = sadd.s32 %s95, 1
      %p99 = scmp.eq.s32.totalorder %s19, 1
      %p100 = scmp.ne.s32.totalorder %s95, %s97
      %p101 = scmp.eq.s32.totalorder %s19, 0
      %p102 = por %p100, %p101
      %p103 = scmp.ne.s32.totalorder %s95, %s97
      %p104 = scmp.eq.s32.totalorder %s24, 1
      %p105 = por %p103, %p104
      %p106 = scmp.ne.s32.totalorder %s97, %s98
      %p107 = scmp.eq.s32.totalorder %s24, 0
      %p108 = por %p106, %p107
      %p109 = scmp.ne.s32.totalorder %s97, %s98
      %p110 = scmp.eq.s32.totalorder %s25, 1
      %p111 = por %p109, %p110
      %p113 = scmp.ne.s32.totalorder %s98, %s112
      %p114 = scmp.eq.s32.totalorder %s25, 0
      %p115 = por %p113, %p114
      %s117 = sadd.s32 %s116, 1
      %p120 = scmp.eq.s32.totalorder %s19, 1
      %p121 = scmp.ne.s32.totalorder %s116, %s118
      %p122 = scmp.eq.s32.totalorder %s19, 0
      %p123 = por %p121, %p122
      %p124 = scmp.ne.s32.totalorder %s116, %s118
      %p125 = scmp.eq.s32.totalorder %s24, 1
      %p126 = por %p124, %p125
      %p127 = scmp.ne.s32.totalorder %s118, %s119
      %p128 = scmp.eq.s32.totalorder %s24, 0
      %p129 = por %p127, %p128
      %p130 = scmp.ne.s32.totalorder %s118, %s119
      %p131 = scmp.eq.s32.totalorder %s25, 1
      %p132 = por %p130, %p131
      %p134 = scmp.ne.s32.totalorder %s119, %s133
      %p135 = scmp.eq.s32.totalorder %s25, 0
      %p136 = por %p134, %p135
      %s137 = ssub.s32 %s19, %s26
      %p138 = scmp.eq.s32.totalorder %s137, 0
      %s140 = sadd.s32 %s139, 1
      %s141 = scalar_select %p138, %s139, %s140
      %p144 = pneg %p138
      %p145 = scmp.eq.s32.totalorder %s19, 1
      %p146 = por %p144, %p145
      %p147 = scmp.ne.s32.totalorder %s139, %s142
      %p148 = scmp.eq.s32.totalorder %s19, 0
      %p149 = por %p147, %p148
      %p150 = scmp.ne.s32.totalorder %s139, %s142
      %p151 = scmp.eq.s32.totalorder %s24, 1
      %p152 = por %p150, %p151
      %p153 = scmp.ne.s32.totalorder %s142, %s143
      %p154 = scmp.eq.s32.totalorder %s24, 0
      %p155 = por %p153, %p154
      %p156 = scmp.ne.s32.totalorder %s142, %s143
      %p157 = scmp.eq.s32.totalorder %s25, 1
      %p158 = por %p156, %p157
      %p160 = scmp.ne.s32.totalorder %s143, %s159
      %p161 = scmp.eq.s32.totalorder %s25, 0
      %p162 = por %p160, %p161
      %p163 = scmp.le.s32.totalorder 1, %s19
      %p164 = scmp.lt.s32.totalorder %s19, 3
      %p165 = pnand %p163, %p164
      %p166 = pneg %p165
      // Predicated region
      $region9: #{tpu_custom_call.1} parent=5 // pred_check
        _
      $region10: #{tpu_custom_call.1} parent=5 // pred_check_branch
        %168 = sbr.rel (%p165) target = $region12
      $region11: #{tpu_custom_call.1} parent=5 // pred_region
        %s169 = ssub.s32 %s19, 1
        // Predicated region
        $region13: #{tpu_custom_call.1} parent=11 // pred_check
          %p170 = pneg %p66
        $region14: #{tpu_custom_call.1} parent=11 // pred_check_branch
          %172 = sbr.rel (%p170) target = $region16
        $region15: #{tpu_custom_call.1} parent=11 // pred_region
          %s174 = ssub.s32 128, 128
          %175 = vsyncadd [#allocation6], %s174
          %s176 = sshll.u32 [#allocation5], 4
          %s177 = int_to_ptr.vmem [resolvable:$true] %s176
          %182 = dma.hbm_to_vmem [thread:$0]  %s1, 128, %s177, [#allocation6], 64, 64, 4
        $region16: #{tpu_custom_call.1} parent=11 // pred_fallthru
          _
        // Predicated region
        $region17: #{tpu_custom_call.1} parent=11 // pred_check
          %p183 = pneg %p87
        $region18: #{tpu_custom_call.1} parent=11 // pred_check_branch
          %185 = sbr.rel (%p183) target = $region20
        $region19: #{tpu_custom_call.1} parent=11 // pred_region
          %s187 = ssub.s32 128, 128
          %188 = vsyncadd [#allocation6], %s187
          %s189 = sshll.u32 [#allocation7], 4
          %s190 = int_to_ptr.vmem [resolvable:$true] %s189
          %195 = dma.hbm_to_vmem [thread:$0]  %s2, 128, %s190, [#allocation6], 64, 64, 4
        $region20: #{tpu_custom_call.1} parent=11 // pred_fallthru
          _
        // Predicated region
        $region21: #{tpu_custom_call.1} parent=11 // pred_check
          %p196 = pneg %p108
        $region22: #{tpu_custom_call.1} parent=11 // pred_check_branch
          %198 = sbr.rel (%p196) target = $region24
        $region23: #{tpu_custom_call.1} parent=11 // pred_region
          %s200 = ssub.s32 128, 128
          %201 = vsyncadd [#allocation9], %s200
          %s202 = sshll.u32 [#allocation8], 4
          %s203 = int_to_ptr.vmem [resolvable:$true] %s202
          %208 = dma.hbm_to_vmem [thread:$0]  %s3, 128, %s203, [#allocation9], 64, 64, 4
        $region24: #{tpu_custom_call.1} parent=11 // pred_fallthru
          _
        // Predicated region
        $region25: #{tpu_custom_call.1} parent=11 // pred_check
          %p209 = pneg %p129
        $region26: #{tpu_custom_call.1} parent=11 // pred_check_branch
          %211 = sbr.rel (%p209) target = $region28
        $region27: #{tpu_custom_call.1} parent=11 // pred_region
          %s213 = ssub.s32 128, 128
          %214 = vsyncadd [#allocation9], %s213
          %s215 = sshll.u32 [#allocation10], 4
          %s216 = int_to_ptr.vmem [resolvable:$true] %s215
          %221 = dma.hbm_to_vmem [thread:$0]  %s4, 128, %s216, [#allocation9], 64, 64, 4
        $region28: #{tpu_custom_call.1} parent=11 // pred_fallthru
          _
      $region12: #{tpu_custom_call.1} parent=5 // pred_fallthru
        _
      %p222 = scmp.lt.s32.totalorder %s19, 2
      // Predicated region
      $region29: #{tpu_custom_call.1} parent=5 // pred_check
        %p223 = pneg %p222
      $region30: #{tpu_custom_call.1} parent=5 // pred_check_branch
        %225 = sbr.rel (%p223) target = $region32
      $region31: #{tpu_custom_call.1} parent=5 // pred_region
        // Predicated region
        $region33: #{tpu_custom_call.1} parent=31 // pred_check
          %p226 = pneg %p39
        $region34: #{tpu_custom_call.1} parent=31 // pred_check_branch
          %228 = sbr.rel (%p226) target = $region36
        $region35: #{tpu_custom_call.1} parent=31 // pred_region
          %s229 = sand.u32 %s29, 1
          %s230 = scalar_lea.sflag [#allocation3], %s229
          %s231 = sand.u32 %s29, 1
          %s232 = smul.addr %s231, 24
          %s233 = scalar_lea.vmem [#allocation2], %s232
          %s234 = smul.u32 3, %s19
          %s236 = ssub.s32 384, 384
          %237 = vsyncadd %s230, %s236
          %s238 = smul.addr %s234, 2
          %s239 = smul.addr %s238, 64
          %s240 = scalar_lea.hbm %s0, %s239
          %s241 = sshll.u32 %s233, 4
          %s242 = int_to_ptr.vmem [resolvable:$true] %s241
          %247 = dma.hbm_to_vmem [thread:$0]  %s240, 384, %s242, %s230, 64, 64, 4
        $region36: #{tpu_custom_call.1} parent=31 // pred_fallthru
          _
      $region32: #{tpu_custom_call.1} parent=5 // pred_fallthru
        _
      %p248 = scmp.le.s32.totalorder 1, %s19
      %p249 = scmp.lt.s32.totalorder %s19, 3
      %p250 = pnand %p248, %p249
      %p251 = pneg %p250
      // Predicated region
      $region37: #{tpu_custom_call.1} parent=5 // pred_check
        _
      $region38: #{tpu_custom_call.1} parent=5 // pred_check_branch
        %253 = sbr.rel (%p250) target = $region40
      $region39: #{tpu_custom_call.1} parent=5 // pred_region
        %s254 = ssub.s32 %s19, 1
        %s255 = sand.u32 %s32, 1
        %s256 = scalar_lea.sflag [#allocation3], %s255
        %s257 = sand.u32 %s32, 1
        %s258 = smul.addr %s257, 24
        %s259 = scalar_lea.vmem [#allocation2], %s258
        // Predicated region
        $region41: #{tpu_custom_call.1} parent=39 // pred_check
          %p260 = pneg %p45
        $region42: #{tpu_custom_call.1} parent=39 // pred_check_branch
          %262 = sbr.rel (%p260) target = $region44
        $region43: #{tpu_custom_call.1} parent=39 // pred_region
          %263 = dma.done %s256, 384
        $region44: #{tpu_custom_call.1} parent=39 // pred_fallthru
          _
        // Predicated region
        $region45: #{tpu_custom_call.1} parent=39 // pred_check
          %p264 = pneg %p66
        $region46: #{tpu_custom_call.1} parent=39 // pred_check_branch
          %266 = sbr.rel (%p264) target = $region48
        $region47: #{tpu_custom_call.1} parent=39 // pred_region
          %267 = dma.done [#allocation6], 128
        $region48: #{tpu_custom_call.1} parent=39 // pred_fallthru
          _
        // Predicated region
        $region49: #{tpu_custom_call.1} parent=39 // pred_check
          %p268 = pneg %p87
        $region50: #{tpu_custom_call.1} parent=39 // pred_check_branch
          %270 = sbr.rel (%p268) target = $region52
        $region51: #{tpu_custom_call.1} parent=39 // pred_region
          %271 = dma.done [#allocation6], 128
        $region52: #{tpu_custom_call.1} parent=39 // pred_fallthru
          _
        // Predicated region
        $region53: #{tpu_custom_call.1} parent=39 // pred_check
          %p272 = pneg %p108
        $region54: #{tpu_custom_call.1} parent=39 // pred_check_branch
          %274 = sbr.rel (%p272) target = $region56
        $region55: #{tpu_custom_call.1} parent=39 // pred_region
          %275 = dma.done [#allocation9], 128
        $region56: #{tpu_custom_call.1} parent=39 // pred_fallthru
          _
        // Predicated region
        $region57: #{tpu_custom_call.1} parent=39 // pred_check
          %p276 = pneg %p129
        $region58: #{tpu_custom_call.1} parent=39 // pred_check_branch
          %278 = sbr.rel (%p276) target = $region60
        $region59: #{tpu_custom_call.1} parent=39 // pred_region
          %279 = dma.done [#allocation9], 128
        $region60: #{tpu_custom_call.1} parent=39 // pred_fallthru
          _
        %s280 = sand.u32 %s32, 1
        %s281 = scalar_lea.sflag [#allocation3], %s280
        %s282 = sand.u32 %s32, 1
        %s283 = smul.addr %s282, 24
        %s284 = scalar_lea.vmem [#allocation2], %s283
        %p285 = pneg %p45
        %p286 = pneg %p42
        %p287 = pneg %p66
        %p288 = pneg %p63
        %p289 = pneg %p87
        %p290 = pneg %p84
        %p291 = pneg %p108
        %p292 = pneg %p105
        %p293 = pneg %p129
        %p294 = pneg %p126
        %p295 = pneg %p155
        %p296 = pneg %p152
        %s297 = sand.u32 %s142, 1
        %s298 = scalar_lea.sflag [#allocation4], %s297
        %s299 = sand.u32 %s142, 1
        %s300 = smul.addr %s299, 48
        %s301 = scalar_lea.vmem [#allocation11], %s300
        %s302 = smul.u32 3, %s24
        %s303 = smul.u32 3, %s24
        %v305 = vld [vmem:[%s259] sm:$0xf]
        %v306 = vld [vmem:[%s259 + $0x4] sm:$0xf]
        %v307 = vld [vmem:[%s259 + $0x8] sm:$0xf]
        %v308 = vld [vmem:[%s259 + $0xc] sm:$0xf]
        %v309 = vld [vmem:[%s259 + $0x10] sm:$0xf]
        %v310 = vld [vmem:[%s259 + $0x14] sm:$0xf]
        %v311 = vld [vmem:[#allocation7] sm:$0xf]
        %v312 = vld [vmem:[#allocation7 + $0x4] sm:$0xf]
        %v313 = vld [vmem:[#allocation10] sm:$0xf]
        %v314 = vld [vmem:[#allocation10 + $0x4] sm:$0xf]
        %v315 = vld [vmem:[#allocation5] sm:$0xf]
        %v316 = vld [vmem:[#allocation5 + $0x4] sm:$0xf]
        %v317 = vld [vmem:[#allocation8] sm:$0xf]
        %v318 = vld [vmem:[#allocation8 + $0x4] sm:$0xf]
        %v325 = vunpack.c.l.b16 %v305
        %v326 = vunpack.c.l.b16 %v306
        %v327 = vunpack.c.l.b16 %v307
        %v328 = vunpack.c.l.b16 %v308
        %v329 = vunpack.c.l.b16 %v309
        %v330 = vunpack.c.l.b16 %v310
        %v331 = vpack.c.b16 %v326, %v325
        %v332 = vpack.c.b16 %v328, %v327
        %v333 = vpack.c.b16 %v330, %v329
        %v336 = vunpack.c.l.b16 %v311
        %v337 = vunpack.c.l.b16 %v312
        %v338 = vpack.c.b16 %v337, %v336
        %vm340 = vcmask 130048
        %v342 = vsel %vm340, %v331, 0
        %v345 = vsel %vm340, %v332, 0
        %v348 = vsel %vm340, %v333, 0
        %350 = vmatprep.subr.bf16.mxu0 0
        %351 = vmatpush1.bf16.msra.mxu0 0
        %352 = vmatprep.subr.bf16.mxu0 0
        %353 = vmatpush1.bf16.msra.mxu0 0
        %354 = vmatprep.subr.bf16.mxu0 0
        %355 = vmatpush1.bf16.msra.mxu0 0
        %356 = vmatprep.subr.bf16.mxu0 0
        %357 = vmatpush1.bf16.msra.mxu0 0
        %358 = vmatprep.subr.bf16.mxu0 0
        %359 = vmatpush1.bf16.msra.mxu0 0
        %360 = vmatprep.subr.bf16.mxu0 0
        %361 = vmatpush1.bf16.msra.mxu0 0
        %362 = vmatprep.subr.bf16.mxu0 0
        %363 = vmatpush1.bf16.msra.mxu0 0
        %364 = vmatprep.subr.bf16.mxu0 0
        %365 = vmatpush1.bf16.msra.mxu0 %v338
        %366 = vmatprep.subr.bf16.mxu0 0
        %367 = vmatpush2.bf16.msra.mxu0 0
        %368 = vmatprep.subr.bf16.mxu0 0
        %369 = vmatpush2.bf16.msra.mxu0 0
        %370 = vmatprep.subr.bf16.mxu0 0
        %371 = vmatpush2.bf16.msra.mxu0 0
        %372 = vmatprep.subr.bf16.mxu0 0
        %373 = vmatpush2.bf16.msra.mxu0 0
        %374 = vmatprep.subr.bf16.mxu0 0
        %375 = vmatpush2.bf16.msra.mxu0 0
        %376 = vmatprep.subr.bf16.mxu0 0
        %377 = vmatpush2.bf16.msra.mxu0 0
        %378 = vmatprep.subr.bf16.mxu0 0
        %379 = vmatpush2.bf16.msra.mxu0 0
        %380 = vmatprep.subr.bf16.mxu0 0
        %381 = vmatpush2.bf16.msra.mxu0 0
        %382 = vmatprep.mubr.bf16.mxu0 0
        %383 = vmatmul.mubr.bf16.gmra.mxu0 %v342
        %v384 = vpop.f32.mrf.mxu0
        %v385 = vadd.f32 0.0, %v384
        %v386 = vpop.f32.mrf.mxu0
        %v387 = vpop.f32.mrf.mxu0
        %v388 = vadd.f32 0.0, %v387
        %v389 = vpop.f32.mrf.mxu0
        %390 = vmatprep.mubr.bf16.mxu0 0
        %391 = vmatmul.mubr.bf16.gmra.mxu0 %v345
        %v392 = vpop.f32.mrf.mxu0
        %v393 = vadd.f32 0.0, %v392
        %v394 = vpop.f32.mrf.mxu0
        %v395 = vpop.f32.mrf.mxu0
        %v396 = vadd.f32 0.0, %v395
        %v397 = vpop.f32.mrf.mxu0
        %398 = vmatprep.mubr.bf16.mxu0 0
        %399 = vmatmul.mubr.bf16.gmra.mxu0 %v348
        %v400 = vpop.f32.mrf.mxu0
        %v401 = vadd.f32 0.0, %v400
        %v402 = vpop.f32.mrf.mxu0
        %v403 = vpop.f32.mrf.mxu0
        %v404 = vadd.f32 0.0, %v403
        %v405 = vpop.f32.mrf.mxu0
        %406 = vdwg.mxu0
        %v407 = vpack.c.bf16 %v388, %v385
        %v408 = vpack.c.bf16 %v396, %v393
        %v409 = vpack.c.bf16 %v404, %v401
        %v412 = vunpack.c.l.b16 %v315
        %v413 = vunpack.c.l.b16 %v316
        %v414 = vpack.c.b16 %v413, %v412
        %v416 = vsel %vm340, %v414, 0
        %418 = vmatprep.subr.bf16.mxu0 0
        %419 = vmatpush1.bf16.msra.mxu0 0
        %420 = vmatprep.subr.bf16.mxu0 0
        %421 = vmatpush1.bf16.msra.mxu0 0
        %422 = vmatprep.subr.bf16.mxu0 0
        %423 = vmatpush1.bf16.msra.mxu0 0
        %424 = vmatprep.subr.bf16.mxu0 0
        %425 = vmatpush1.bf16.msra.mxu0 0
        %426 = vmatprep.subr.bf16.mxu0 0
        %427 = vmatpush1.bf16.msra.mxu0 0
        %428 = vmatprep.subr.bf16.mxu0 0
        %429 = vmatpush1.bf16.msra.mxu0 0
        %430 = vmatprep.subr.bf16.mxu0 0
        %431 = vmatpush1.bf16.msra.mxu0 0
        %432 = vmatprep.subr.bf16.mxu0 0
        %433 = vmatpush1.bf16.msra.mxu0 %v407
        %434 = vmatprep.subr.bf16.mxu0 0
        %435 = vmatpush2.bf16.msra.mxu0 0
        %436 = vmatprep.subr.bf16.mxu0 0
        %437 = vmatpush2.bf16.msra.mxu0 0
        %438 = vmatprep.subr.bf16.mxu0 0
        %439 = vmatpush2.bf16.msra.mxu0 0
        %440 = vmatprep.subr.bf16.mxu0 0
        %441 = vmatpush2.bf16.msra.mxu0 0
        %442 = vmatprep.subr.bf16.mxu0 0
        %443 = vmatpush2.bf16.msra.mxu0 0
        %444 = vmatprep.subr.bf16.mxu0 0
        %445 = vmatpush2.bf16.msra.mxu0 0
        %446 = vmatprep.subr.bf16.mxu0 0
        %447 = vmatpush2.bf16.msra.mxu0 0
        %448 = vmatprep.subr.bf16.mxu0 0
        %449 = vmatpush2.bf16.msra.mxu0 0
        %450 = vmatprep.mubr.bf16.mxu0 0
        %451 = vmatmul.mubr.bf16.gmra.mxu0 %v416
        %v452 = vpop.f32.mrf.mxu0
        %v453 = vadd.f32 0.0, %v452
        %v454 = vpop.f32.mrf.mxu0
        %v455 = vpop.f32.mrf.mxu0
        %v456 = vadd.f32 0.0, %v455
        %v457 = vpop.f32.mrf.mxu0
        %458 = vdwg.mxu0
        %459 = vmatprep.subr.bf16.mxu0 0
        %460 = vmatpush1.bf16.msra.mxu0 0
        %461 = vmatprep.subr.bf16.mxu0 0
        %462 = vmatpush1.bf16.msra.mxu0 0
        %463 = vmatprep.subr.bf16.mxu0 0
        %464 = vmatpush1.bf16.msra.mxu0 0
        %465 = vmatprep.subr.bf16.mxu0 0
        %466 = vmatpush1.bf16.msra.mxu0 0
        %467 = vmatprep.subr.bf16.mxu0 0
        %468 = vmatpush1.bf16.msra.mxu0 0
        %469 = vmatprep.subr.bf16.mxu0 0
        %470 = vmatpush1.bf16.msra.mxu0 0
        %471 = vmatprep.subr.bf16.mxu0 0
        %472 = vmatpush1.bf16.msra.mxu0 0
        %473 = vmatprep.subr.bf16.mxu0 0
        %474 = vmatpush1.bf16.msra.mxu0 %v408
        %475 = vmatprep.subr.bf16.mxu0 0
        %476 = vmatpush2.bf16.msra.mxu0 0
        %477 = vmatprep.subr.bf16.mxu0 0
        %478 = vmatpush2.bf16.msra.mxu0 0
        %479 = vmatprep.subr.bf16.mxu0 0
        %480 = vmatpush2.bf16.msra.mxu0 0
        %481 = vmatprep.subr.bf16.mxu0 0
        %482 = vmatpush2.bf16.msra.mxu0 0
        %483 = vmatprep.subr.bf16.mxu0 0
        %484 = vmatpush2.bf16.msra.mxu0 0
        %485 = vmatprep.subr.bf16.mxu0 0
        %486 = vmatpush2.bf16.msra.mxu0 0
        %487 = vmatprep.subr.bf16.mxu0 0
        %488 = vmatpush2.bf16.msra.mxu0 0
        %489 = vmatprep.subr.bf16.mxu0 0
        %490 = vmatpush2.bf16.msra.mxu0 0
        %491 = vmatprep.mubr.bf16.mxu0 0
        %492 = vmatmul.mubr.bf16.gmra.mxu0 %v416
        %v493 = vpop.f32.mrf.mxu0
        %v494 = vadd.f32 0.0, %v493
        %v495 = vpop.f32.mrf.mxu0
        %v496 = vpop.f32.mrf.mxu0
        %v497 = vadd.f32 0.0, %v496
        %v498 = vpop.f32.mrf.mxu0
        %499 = vdwg.mxu0
        %500 = vmatprep.subr.bf16.mxu0 0
        %501 = vmatpush1.bf16.msra.mxu0 0
        %502 = vmatprep.subr.bf16.mxu0 0
        %503 = vmatpush1.bf16.msra.mxu0 0
        %504 = vmatprep.subr.bf16.mxu0 0
        %505 = vmatpush1.bf16.msra.mxu0 0
        %506 = vmatprep.subr.bf16.mxu0 0
        %507 = vmatpush1.bf16.msra.mxu0 0
        %508 = vmatprep.subr.bf16.mxu0 0
        %509 = vmatpush1.bf16.msra.mxu0 0
        %510 = vmatprep.subr.bf16.mxu0 0
        %511 = vmatpush1.bf16.msra.mxu0 0
        %512 = vmatprep.subr.bf16.mxu0 0
        %513 = vmatpush1.bf16.msra.mxu0 0
        %514 = vmatprep.subr.bf16.mxu0 0
        %515 = vmatpush1.bf16.msra.mxu0 %v409
        %516 = vmatprep.subr.bf16.mxu0 0
        %517 = vmatpush2.bf16.msra.mxu0 0
        %518 = vmatprep.subr.bf16.mxu0 0
        %519 = vmatpush2.bf16.msra.mxu0 0
        %520 = vmatprep.subr.bf16.mxu0 0
        %521 = vmatpush2.bf16.msra.mxu0 0
        %522 = vmatprep.subr.bf16.mxu0 0
        %523 = vmatpush2.bf16.msra.mxu0 0
        %524 = vmatprep.subr.bf16.mxu0 0
        %525 = vmatpush2.bf16.msra.mxu0 0
        %526 = vmatprep.subr.bf16.mxu0 0
        %527 = vmatpush2.bf16.msra.mxu0 0
        %528 = vmatprep.subr.bf16.mxu0 0
        %529 = vmatpush2.bf16.msra.mxu0 0
        %530 = vmatprep.subr.bf16.mxu0 0
        %531 = vmatpush2.bf16.msra.mxu0 0
        %532 = vmatprep.mubr.bf16.mxu0 0
        %533 = vmatmul.mubr.bf16.gmra.mxu0 %v416
        %v534 = vpop.f32.mrf.mxu0
        %v535 = vadd.f32 0.0, %v534
        %v536 = vpop.f32.mrf.mxu0
        %v537 = vpop.f32.mrf.mxu0
        %v538 = vadd.f32 0.0, %v537
        %v539 = vpop.f32.mrf.mxu0
        %540 = vdwg.mxu0
        %v541 = vmul.f32 %v453, 1.25
        %v542 = vmul.f32 %v456, 1.25
        %v543 = vmul.f32 %v494, 1.25
        %v544 = vmul.f32 %v497, 1.25
        %v545 = vmul.f32 %v535, 1.25
        %v546 = vmul.f32 %v538, 1.25
        %v547 = vmax.f32 %v541, 0.0
        %v548 = vmax.f32 %v542, 0.0
        %v549 = vmax.f32 %v543, 0.0
        %v550 = vmax.f32 %v544, 0.0
        %v551 = vmax.f32 %v545, 0.0
        %v552 = vmax.f32 %v546, 0.0
        %v553 = vmin.f32 %v547, 1.0
        %v554 = vmin.f32 %v548, 1.0
        %v555 = vmin.f32 %v549, 1.0
        %v556 = vmin.f32 %v550, 1.0
        %v557 = vmin.f32 %v551, 1.0
        %v558 = vmin.f32 %v552, 1.0
        %v559 = vpack.c.bf16 %v554, %v553
        %v560 = vpack.c.bf16 %v556, %v555
        %v561 = vpack.c.bf16 %v558, %v557
        %v564 = vunpack.c.l.b16 %v317
        %v565 = vunpack.c.l.b16 %v318
        %v566 = vpack.c.b16 %v565, %v564
        %v568 = vsel %vm340, %v566, 0
        %570 = vmatprep.subr.bf16.mxu0 0
        %571 = vmatpush1.bf16.msra.mxu0 0
        %572 = vmatprep.subr.bf16.mxu0 0
        %573 = vmatpush1.bf16.msra.mxu0 0
        %574 = vmatprep.subr.bf16.mxu0 0
        %575 = vmatpush1.bf16.msra.mxu0 0
        %576 = vmatprep.subr.bf16.mxu0 0
        %577 = vmatpush1.bf16.msra.mxu0 0
        %578 = vmatprep.subr.bf16.mxu0 0
        %579 = vmatpush1.bf16.msra.mxu0 0
        %580 = vmatprep.subr.bf16.mxu0 0
        %581 = vmatpush1.bf16.msra.mxu0 0
        %582 = vmatprep.subr.bf16.mxu0 0
        %583 = vmatpush1.bf16.msra.mxu0 0
        %584 = vmatprep.subr.bf16.mxu0 0
        %585 = vmatpush1.bf16.msra.mxu0 %v559
        %586 = vmatprep.subr.bf16.mxu0 0
        %587 = vmatpush2.bf16.msra.mxu0 0
        %588 = vmatprep.subr.bf16.mxu0 0
        %589 = vmatpush2.bf16.msra.mxu0 0
        %590 = vmatprep.subr.bf16.mxu0 0
        %591 = vmatpush2.bf16.msra.mxu0 0
        %592 = vmatprep.subr.bf16.mxu0 0
        %593 = vmatpush2.bf16.msra.mxu0 0
        %594 = vmatprep.subr.bf16.mxu0 0
        %595 = vmatpush2.bf16.msra.mxu0 0
        %596 = vmatprep.subr.bf16.mxu0 0
        %597 = vmatpush2.bf16.msra.mxu0 0
        %598 = vmatprep.subr.bf16.mxu0 0
        %599 = vmatpush2.bf16.msra.mxu0 0
        %600 = vmatprep.subr.bf16.mxu0 0
        %601 = vmatpush2.bf16.msra.mxu0 0
        %602 = vmatprep.mubr.bf16.mxu0 0
        %603 = vmatmul.mubr.bf16.gmra.mxu0 %v568
        %v604 = vpop.f32.mrf.mxu0
        %v605 = vadd.f32 0.0, %v604
        %v606 = vpop.f32.mrf.mxu0
        %v607 = vpop.f32.mrf.mxu0
        %v608 = vadd.f32 0.0, %v607
        %v609 = vpop.f32.mrf.mxu0
        %610 = vdwg.mxu0
        %611 = vmatprep.subr.bf16.mxu0 0
        %612 = vmatpush1.bf16.msra.mxu0 0
        %613 = vmatprep.subr.bf16.mxu0 0
        %614 = vmatpush1.bf16.msra.mxu0 0
        %615 = vmatprep.subr.bf16.mxu0 0
        %616 = vmatpush1.bf16.msra.mxu0 0
        %617 = vmatprep.subr.bf16.mxu0 0
        %618 = vmatpush1.bf16.msra.mxu0 0
        %619 = vmatprep.subr.bf16.mxu0 0
        %620 = vmatpush1.bf16.msra.mxu0 0
        %621 = vmatprep.subr.bf16.mxu0 0
        %622 = vmatpush1.bf16.msra.mxu0 0
        %623 = vmatprep.subr.bf16.mxu0 0
        %624 = vmatpush1.bf16.msra.mxu0 0
        %625 = vmatprep.subr.bf16.mxu0 0
        %626 = vmatpush1.bf16.msra.mxu0 %v560
        %627 = vmatprep.subr.bf16.mxu0 0
        %628 = vmatpush2.bf16.msra.mxu0 0
        %629 = vmatprep.subr.bf16.mxu0 0
        %630 = vmatpush2.bf16.msra.mxu0 0
        %631 = vmatprep.subr.bf16.mxu0 0
        %632 = vmatpush2.bf16.msra.mxu0 0
        %633 = vmatprep.subr.bf16.mxu0 0
        %634 = vmatpush2.bf16.msra.mxu0 0
        %635 = vmatprep.subr.bf16.mxu0 0
        %636 = vmatpush2.bf16.msra.mxu0 0
        %637 = vmatprep.subr.bf16.mxu0 0
        %638 = vmatpush2.bf16.msra.mxu0 0
        %639 = vmatprep.subr.bf16.mxu0 0
        %640 = vmatpush2.bf16.msra.mxu0 0
        %641 = vmatprep.subr.bf16.mxu0 0
        %642 = vmatpush2.bf16.msra.mxu0 0
        %643 = vmatprep.mubr.bf16.mxu0 0
        %644 = vmatmul.mubr.bf16.gmra.mxu0 %v568
        %v645 = vpop.f32.mrf.mxu0
        %v646 = vadd.f32 0.0, %v645
        %v647 = vpop.f32.mrf.mxu0
        %v648 = vpop.f32.mrf.mxu0
        %v649 = vadd.f32 0.0, %v648
        %v650 = vpop.f32.mrf.mxu0
        %651 = vdwg.mxu0
        %652 = vmatprep.subr.bf16.mxu0 0
        %653 = vmatpush1.bf16.msra.mxu0 0
        %654 = vmatprep.subr.bf16.mxu0 0
        %655 = vmatpush1.bf16.msra.mxu0 0
        %656 = vmatprep.subr.bf16.mxu0 0
        %657 = vmatpush1.bf16.msra.mxu0 0
        %658 = vmatprep.subr.bf16.mxu0 0
        %659 = vmatpush1.bf16.msra.mxu0 0
        %660 = vmatprep.subr.bf16.mxu0 0
        %661 = vmatpush1.bf16.msra.mxu0 0
        %662 = vmatprep.subr.bf16.mxu0 0
        %663 = vmatpush1.bf16.msra.mxu0 0
        %664 = vmatprep.subr.bf16.mxu0 0
        %665 = vmatpush1.bf16.msra.mxu0 0
        %666 = vmatprep.subr.bf16.mxu0 0
        %667 = vmatpush1.bf16.msra.mxu0 %v561
        %668 = vmatprep.subr.bf16.mxu0 0
        %669 = vmatpush2.bf16.msra.mxu0 0
        %670 = vmatprep.subr.bf16.mxu0 0
        %671 = vmatpush2.bf16.msra.mxu0 0
        %672 = vmatprep.subr.bf16.mxu0 0
        %673 = vmatpush2.bf16.msra.mxu0 0
        %674 = vmatprep.subr.bf16.mxu0 0
        %675 = vmatpush2.bf16.msra.mxu0 0
        %676 = vmatprep.subr.bf16.mxu0 0
        %677 = vmatpush2.bf16.msra.mxu0 0
        %678 = vmatprep.subr.bf16.mxu0 0
        %679 = vmatpush2.bf16.msra.mxu0 0
        %680 = vmatprep.subr.bf16.mxu0 0
        %681 = vmatpush2.bf16.msra.mxu0 0
        %682 = vmatprep.subr.bf16.mxu0 0
        %683 = vmatpush2.bf16.msra.mxu0 0
        %684 = vmatprep.mubr.bf16.mxu0 0
        %685 = vmatmul.mubr.bf16.gmra.mxu0 %v568
        %v686 = vpop.f32.mrf.mxu0
        %v687 = vadd.f32 0.0, %v686
        %v688 = vpop.f32.mrf.mxu0
        %v689 = vpop.f32.mrf.mxu0
        %v690 = vadd.f32 0.0, %v689
        %v691 = vpop.f32.mrf.mxu0
        %692 = vdwg.mxu0
        %v693 = vpack.c.bf16 %v608, %v605
        %v694 = vpack.c.bf16 %v649, %v646
        %v695 = vpack.c.bf16 %v690, %v687
        %v698 = vunpack.c.l.b16 %v313
        %v699 = vunpack.c.l.b16 %v314
        %v700 = vpack.c.b16 %v699, %v698
        %v703 = vsel %vm340, %v693, 0
        %v706 = vsel %vm340, %v694, 0
        %v709 = vsel %vm340, %v695, 0
        %711 = vmatprep.subr.bf16.mxu0 0
        %712 = vmatpush1.bf16.msra.mxu0 0
        %713 = vmatprep.subr.bf16.mxu0 0
        %714 = vmatpush1.bf16.msra.mxu0 0
        %715 = vmatprep.subr.bf16.mxu0 0
        %716 = vmatpush1.bf16.msra.mxu0 0
        %717 = vmatprep.subr.bf16.mxu0 0
        %718 = vmatpush1.bf16.msra.mxu0 0
        %719 = vmatprep.subr.bf16.mxu0 0
        %720 = vmatpush1.bf16.msra.mxu0 0
        %721 = vmatprep.subr.bf16.mxu0 0
        %722 = vmatpush1.bf16.msra.mxu0 0
        %723 = vmatprep.subr.bf16.mxu0 0
        %724 = vmatpush1.bf16.msra.mxu0 0
        %725 = vmatprep.subr.bf16.mxu0 0
        %726 = vmatpush1.bf16.msra.mxu0 %v700
        %727 = vmatprep.subr.bf16.mxu0 0
        %728 = vmatpush2.bf16.msra.mxu0 0
        %729 = vmatprep.subr.bf16.mxu0 0
        %730 = vmatpush2.bf16.msra.mxu0 0
        %731 = vmatprep.subr.bf16.mxu0 0
        %732 = vmatpush2.bf16.msra.mxu0 0
        %733 = vmatprep.subr.bf16.mxu0 0
        %734 = vmatpush2.bf16.msra.mxu0 0
        %735 = vmatprep.subr.bf16.mxu0 0
        %736 = vmatpush2.bf16.msra.mxu0 0
        %737 = vmatprep.subr.bf16.mxu0 0
        %738 = vmatpush2.bf16.msra.mxu0 0
        %739 = vmatprep.subr.bf16.mxu0 0
        %740 = vmatpush2.bf16.msra.mxu0 0
        %741 = vmatprep.subr.bf16.mxu0 0
        %742 = vmatpush2.bf16.msra.mxu0 0
        %743 = vmatprep.mubr.bf16.mxu0 0
        %744 = vmatmul.mubr.bf16.gmra.mxu0 %v703
        %v745 = vpop.f32.mrf.mxu0
        %v746 = vadd.f32 0.0, %v745
        %v747 = vpop.f32.mrf.mxu0
        %v748 = vpop.f32.mrf.mxu0
        %v749 = vadd.f32 0.0, %v748
        %v750 = vpop.f32.mrf.mxu0
        %751 = vmatprep.mubr.bf16.mxu0 0
        %752 = vmatmul.mubr.bf16.gmra.mxu0 %v706
        %v753 = vpop.f32.mrf.mxu0
        %v754 = vadd.f32 0.0, %v753
        %v755 = vpop.f32.mrf.mxu0
        %v756 = vpop.f32.mrf.mxu0
        %v757 = vadd.f32 0.0, %v756
        %v758 = vpop.f32.mrf.mxu0
        %759 = vmatprep.mubr.bf16.mxu0 0
        %760 = vmatmul.mubr.bf16.gmra.mxu0 %v709
        %v761 = vpop.f32.mrf.mxu0
        %v762 = vadd.f32 0.0, %v761
        %v763 = vpop.f32.mrf.mxu0
        %v764 = vpop.f32.mrf.mxu0
        %v765 = vadd.f32 0.0, %v764
        %v766 = vpop.f32.mrf.mxu0
        %767 = vdwg.mxu0
        %v768 = vsub.f32 1.0, %v746
        %v769 = vsub.f32 1.0, %v749
        %v770 = vsub.f32 1.0, %v754
        %v771 = vsub.f32 1.0, %v757
        %v772 = vsub.f32 1.0, %v762
        %v773 = vsub.f32 1.0, %v765
        %v774 = vmax.f32 %v768, 0.0
        %v775 = vmax.f32 %v769, 0.0
        %v776 = vmax.f32 %v770, 0.0
        %v777 = vmax.f32 %v771, 0.0
        %v778 = vmax.f32 %v772, 0.0
        %v779 = vmax.f32 %v773, 0.0
        %v780 = vmin.f32 %v774, 1.0
        %v781 = vmin.f32 %v775, 1.0
        %v782 = vmin.f32 %v776, 1.0
        %v783 = vmin.f32 %v777, 1.0
        %v784 = vmin.f32 %v778, 1.0
        %v785 = vmin.f32 %v779, 1.0
        %v786 = vmul.f32 %v780, 3.984375
        %v787 = vmul.f32 %v781, 3.984375
        %v788 = vmul.f32 %v782, 3.984375
        %v789 = vmul.f32 %v783, 3.984375
        %v790 = vmul.f32 %v784, 3.984375
        %v791 = vmul.f32 %v785, 3.984375
        %v792 = vfloor.f32 %v786
        %v793 = vfloor.f32 %v787
        %v794 = vfloor.f32 %v788
        %v795 = vfloor.f32 %v789
        %v796 = vfloor.f32 %v790
        %v797 = vfloor.f32 %v791
        %v798 = vmul.f32 %v792, 0.2509804
        %v799 = vmul.f32 %v793, 0.2509804
        %v800 = vmul.f32 %v794, 0.2509804
        %v801 = vmul.f32 %v795, 0.2509804
        %v802 = vmul.f32 %v796, 0.2509804
        %v803 = vmul.f32 %v797, 0.2509804
        %vm804 = vcmp.ge.f32.partialorder %v798, 0.7529412
        %vm805 = vcmp.ge.f32.partialorder %v799, 0.7529412
        %vm806 = vcmp.ge.f32.partialorder %v800, 0.7529412
        %vm807 = vcmp.ge.f32.partialorder %v801, 0.7529412
        %vm808 = vcmp.ge.f32.partialorder %v802, 0.7529412
        %vm809 = vcmp.ge.f32.partialorder %v803, 0.7529412
        %v810 = vsub.f32 1.0, %v798
        %v811 = vsub.f32 1.0, %v799
        %v812 = vsub.f32 1.0, %v800
        %v813 = vsub.f32 1.0, %v801
        %v814 = vsub.f32 1.0, %v802
        %v815 = vsub.f32 1.0, %v803
        %v816 = vsel %vm804, %v810, %v798
        %v817 = vsel %vm805, %v811, %v799
        %v818 = vsel %vm806, %v812, %v800
        %v819 = vsel %vm807, %v813, %v801
        %v820 = vsel %vm808, %v814, %v802
        %v821 = vsel %vm809, %v815, %v803
        %v822 = vlaneseq
        %v823 = vshrl.u32 %v822, 7
        %v824 = vadd.s32 %v823, 8
        %v825 = vlaneseq
        %v826 = vand.u32 %v825, 127
        %vm827 = vcmp.gt.s32.totalorder %v823, 0
        %vm828 = vcmp.gt.s32.totalorder %v824, 0
        %vm829 = vcmp.lt.s32.totalorder %v823, 15
        %vm830 = vcmp.lt.s32.totalorder %v824, 15
        %vm831 = vmand %vm827, %vm829
        %vm832 = vmand %vm828, %vm830
        %vm833 = vcmp.gt.s32.totalorder %v826, 0
        %vm834 = vmand %vm831, %vm833
        %vm835 = vmand %vm832, %vm833
        %vm836 = vcmp.lt.s32.totalorder %v826, 15
        %vm837 = vmand %vm834, %vm836
        %vm838 = vmand %vm835, %vm836
        %v839 = vrot.slane %v816, 7
        %v840 = vrot.slane %v817, 7
        %v841 = vrot.slane %v818, 7
        %v842 = vrot.slane %v819, 7
        %v843 = vrot.slane %v820, 7
        %v844 = vrot.slane %v821, 7
        %vm845 = vcmp.lt.s32.totalorder %v823, 1
        %v846 = vsel %vm845, %v843, %v844
        %v847 = vsel %vm845, %v842, %v843
        %v848 = vsel %vm845, %v841, %v842
        %v849 = vsel %vm845, %v840, %v841
        %v850 = vsel %vm845, %v839, %v840
        %v851 = vsel %vm845, %v844, %v839
        %v852 = vadd.f32 %v816, %v851
        %v853 = vadd.f32 %v817, %v850
        %v854 = vadd.f32 %v818, %v849
        %v855 = vadd.f32 %v819, %v848
        %v856 = vadd.f32 %v820, %v847
        %v857 = vadd.f32 %v821, %v846
        %v858 = vrot.slane %v816, 1
        %v859 = vrot.slane %v817, 1
        %v860 = vrot.slane %v818, 1
        %v861 = vrot.slane %v819, 1
        %v862 = vrot.slane %v820, 1
        %v863 = vrot.slane %v821, 1
        %vm864 = vcmp.lt.s32.totalorder %v823, 7
        %v865 = vsel %vm864, %v862, %v863
        %v866 = vsel %vm864, %v861, %v862
        %v867 = vsel %vm864, %v860, %v861
        %v868 = vsel %vm864, %v859, %v860
        %v869 = vsel %vm864, %v858, %v859
        %v870 = vsel %vm864, %v863, %v858
        %v871 = vadd.f32 %v852, %v869
        %v872 = vadd.f32 %v853, %v868
        %v873 = vadd.f32 %v854, %v867
        %v874 = vadd.f32 %v855, %v866
        %v875 = vadd.f32 %v856, %v865
        %v876 = vadd.f32 %v857, %v870
        %vm877 = vcmask 1047680
        %878 = vrot.lane.b32.xlu0 %v871, 16
        %v879 = vpop.permute.xlu0 %878
        %v880 = vsel %vm877, %v879, %v871
        %881 = vrot.lane.b32.xlu0 %v872, 16
        %v882 = vpop.permute.xlu0 %881
        %v883 = vsel %vm877, %v882, %v872
        %884 = vrot.lane.b32.xlu0 %v873, 16
        %v885 = vpop.permute.xlu0 %884
        %v886 = vsel %vm877, %v885, %v873
        %887 = vrot.lane.b32.xlu0 %v874, 16
        %v888 = vpop.permute.xlu0 %887
        %v889 = vsel %vm877, %v888, %v874
        %890 = vrot.lane.b32.xlu0 %v875, 16
        %v891 = vpop.permute.xlu0 %890
        %v892 = vsel %vm877, %v891, %v875
        %893 = vrot.lane.b32.xlu0 %v876, 16
        %v894 = vpop.permute.xlu0 %893
        %v895 = vsel %vm877, %v894, %v876
        %896 = vrot.lane.b32.xlu0 %v880, 16
        %v897 = vpop.permute.xlu0 %896
        %898 = vrot.lane.b32.xlu0 %v883, 16
        %v899 = vpop.permute.xlu0 %898
        %900 = vrot.lane.b32.xlu0 %v886, 16
        %v901 = vpop.permute.xlu0 %900
        %902 = vrot.lane.b32.xlu0 %v889, 16
        %v903 = vpop.permute.xlu0 %902
        %904 = vrot.lane.b32.xlu0 %v892, 16
        %v905 = vpop.permute.xlu0 %904
        %906 = vrot.lane.b32.xlu0 %v895, 16
        %v907 = vpop.permute.xlu0 %906
        %v908 = vsel %vm877, %v897, %v871
        %v909 = vsel %vm877, %v899, %v872
        %v910 = vsel %vm877, %v901, %v873
        %v911 = vsel %vm877, %v903, %v874
        %v912 = vsel %vm877, %v905, %v875
        %v913 = vsel %vm877, %v907, %v876
        %920 = vrot.lane.b32.xlu0 %v908, 113
        %v921 = vpop.permute.xlu0 %920
        %922 = vrot.lane.b32.xlu0 %v909, 113
        %v923 = vpop.permute.xlu0 %922
        %924 = vrot.lane.b32.xlu0 %v910, 113
        %v925 = vpop.permute.xlu0 %924
        %926 = vrot.lane.b32.xlu0 %v911, 113
        %v927 = vpop.permute.xlu0 %926
        %928 = vrot.lane.b32.xlu0 %v912, 113
        %v929 = vpop.permute.xlu0 %928
        %930 = vrot.lane.b32.xlu0 %v913, 113
        %v931 = vpop.permute.xlu0 %930
        %v938 = vadd.f32 %v871, %v921
        %v939 = vadd.f32 %v872, %v923
        %v940 = vadd.f32 %v873, %v925
        %v941 = vadd.f32 %v874, %v927
        %v942 = vadd.f32 %v875, %v929
        %v943 = vadd.f32 %v876, %v931
        %944 = vrot.lane.b32.xlu0 %v908, 127
        %v945 = vpop.permute.xlu0 %944
        %946 = vrot.lane.b32.xlu0 %v909, 127
        %v947 = vpop.permute.xlu0 %946
        %948 = vrot.lane.b32.xlu0 %v910, 127
        %v949 = vpop.permute.xlu0 %948
        %950 = vrot.lane.b32.xlu0 %v911, 127
        %v951 = vpop.permute.xlu0 %950
        %952 = vrot.lane.b32.xlu0 %v912, 127
        %v953 = vpop.permute.xlu0 %952
        %954 = vrot.lane.b32.xlu0 %v913, 127
        %v955 = vpop.permute.xlu0 %954
        %v962 = vadd.f32 %v938, %v945
        %v963 = vadd.f32 %v939, %v947
        %v964 = vadd.f32 %v940, %v949
        %v965 = vadd.f32 %v941, %v951
        %v966 = vadd.f32 %v942, %v953
        %v967 = vadd.f32 %v943, %v955
        %v968 = vmul.f32 %v816, 4.0
        %v969 = vmul.f32 %v817, 4.0
        %v970 = vmul.f32 %v818, 4.0
        %v971 = vmul.f32 %v819, 4.0
        %v972 = vmul.f32 %v820, 4.0
        %v973 = vmul.f32 %v821, 4.0
        %v974 = vadd.f32 %v962, %v968
        %v975 = vadd.f32 %v963, %v969
        %v976 = vadd.f32 %v964, %v970
        %v977 = vadd.f32 %v965, %v971
        %v978 = vadd.f32 %v966, %v972
        %v979 = vadd.f32 %v967, %v973
        %v980 = vmul.f32 %v974, 0.07692308
        %v981 = vmul.f32 %v975, 0.07692308
        %v982 = vmul.f32 %v976, 0.07692308
        %v983 = vmul.f32 %v977, 0.07692308
        %v984 = vmul.f32 %v978, 0.07692308
        %v985 = vmul.f32 %v979, 0.07692308
        %v986 = vmul.f32 %v816, 2.0
        %v987 = vmul.f32 %v817, 2.0
        %v988 = vmul.f32 %v818, 2.0
        %v989 = vmul.f32 %v819, 2.0
        %v990 = vmul.f32 %v820, 2.0
        %v991 = vmul.f32 %v821, 2.0
        %v992 = vsub.f32 %v986, %v980
        %v993 = vsub.f32 %v987, %v981
        %v994 = vsub.f32 %v988, %v982
        %v995 = vsub.f32 %v989, %v983
        %v996 = vsub.f32 %v990, %v984
        %v997 = vsub.f32 %v991, %v985
        %v998 = vmax.f32 %v992, 0.0
        %v999 = vmax.f32 %v993, 0.0
        %v1000 = vmax.f32 %v994, 0.0
        %v1001 = vmax.f32 %v995, 0.0
        %v1002 = vmax.f32 %v996, 0.0
        %v1003 = vmax.f32 %v997, 0.0
        %v1004 = vmin.f32 %v998, 1.0
        %v1005 = vmin.f32 %v999, 1.0
        %v1006 = vmin.f32 %v1000, 1.0
        %v1007 = vmin.f32 %v1001, 1.0
        %v1008 = vmin.f32 %v1002, 1.0
        %v1009 = vmin.f32 %v1003, 1.0
        %v1010 = vsel %vm837, %v1004, %v816
        %v1011 = vsel %vm838, %v1005, %v817
        %v1012 = vsel %vm837, %v1006, %v818
        %v1013 = vsel %vm838, %v1007, %v819
        %v1014 = vsel %vm837, %v1008, %v820
        %v1015 = vsel %vm838, %v1009, %v821
        %v1016 = vsel %vm340, %v1010, inf
        %1017 = vmin.xlane.f32.xlu0 %v1016
        %v1018 = vpop.xlane.xlu0 %1017
        %v1019 = vsel %vm340, %v1011, inf
        %1020 = vmin.xlane.f32.xlu0 %v1019
        %v1021 = vpop.xlane.xlu0 %1020
        %v1022 = vsel %vm340, %v1012, inf
        %1023 = vmin.xlane.f32.xlu0 %v1022
        %v1024 = vpop.xlane.xlu0 %1023
        %v1025 = vsel %vm340, %v1013, inf
        %1026 = vmin.xlane.f32.xlu0 %v1025
        %v1027 = vpop.xlane.xlu0 %1026
        %v1028 = vsel %vm340, %v1014, inf
        %1029 = vmin.xlane.f32.xlu0 %v1028
        %v1030 = vpop.xlane.xlu0 %1029
        %v1031 = vsel %vm340, %v1015, inf
        %1032 = vmin.xlane.f32.xlu0 %v1031
        %v1033 = vpop.xlane.xlu0 %1032
        %v1034 = vmin.f32 %v1018, %v1021
        %v1035 = vrot.slane %v1034, 4
        %v1036 = vmin.f32 %v1034, %v1035
        %v1037 = vrot.slane %v1036, 2
        %v1038 = vmin.f32 %v1036, %v1037
        %v1039 = vrot.slane %v1038, 1
        %v1040 = vmin.f32 %v1038, %v1039
        %v1041 = vmin.f32 %v1024, %v1027
        %v1042 = vrot.slane %v1041, 4
        %v1043 = vmin.f32 %v1041, %v1042
        %v1044 = vrot.slane %v1043, 2
        %v1045 = vmin.f32 %v1043, %v1044
        %v1046 = vrot.slane %v1045, 1
        %v1047 = vmin.f32 %v1045, %v1046
        %v1048 = vmin.f32 %v1030, %v1033
        %v1049 = vrot.slane %v1048, 4
        %v1050 = vmin.f32 %v1048, %v1049
        %v1051 = vrot.slane %v1050, 2
        %v1052 = vmin.f32 %v1050, %v1051
        %v1053 = vrot.slane %v1052, 1
        %v1054 = vmin.f32 %v1052, %v1053
        %v1055 = vsel %vm340, %v1010, -inf
        %1056 = vmax.xlane.f32.xlu0 %v1055
        %v1057 = vpop.xlane.xlu0 %1056
        %v1058 = vsel %vm340, %v1011, -inf
        %1059 = vmax.xlane.f32.xlu0 %v1058
        %v1060 = vpop.xlane.xlu0 %1059
        %v1061 = vsel %vm340, %v1012, -inf
        %1062 = vmax.xlane.f32.xlu0 %v1061
        %v1063 = vpop.xlane.xlu0 %1062
        %v1064 = vsel %vm340, %v1013, -inf
        %1065 = vmax.xlane.f32.xlu0 %v1064
        %v1066 = vpop.xlane.xlu0 %1065
        %v1067 = vsel %vm340, %v1014, -inf
        %1068 = vmax.xlane.f32.xlu0 %v1067
        %v1069 = vpop.xlane.xlu0 %1068
        %v1070 = vsel %vm340, %v1015, -inf
        %1071 = vmax.xlane.f32.xlu0 %v1070
        %v1072 = vpop.xlane.xlu0 %1071
        %v1073 = vmax.f32 %v1057, %v1060
        %v1074 = vrot.slane %v1073, 4
        %v1075 = vmax.f32 %v1073, %v1074
        %v1076 = vrot.slane %v1075, 2
        %v1077 = vmax.f32 %v1075, %v1076
        %v1078 = vrot.slane %v1077, 1
        %v1079 = vmax.f32 %v1077, %v1078
        %v1080 = vmax.f32 %v1063, %v1066
        %v1081 = vrot.slane %v1080, 4
        %v1082 = vmax.f32 %v1080, %v1081
        %v1083 = vrot.slane %v1082, 2
        %v1084 = vmax.f32 %v1082, %v1083
        %v1085 = vrot.slane %v1084, 1
        %v1086 = vmax.f32 %v1084, %v1085
        %v1087 = vmax.f32 %v1069, %v1072
        %v1088 = vrot.slane %v1087, 4
        %v1089 = vmax.f32 %v1087, %v1088
        %v1090 = vrot.slane %v1089, 2
        %v1091 = vmax.f32 %v1089, %v1090
        %v1092 = vrot.slane %v1091, 1
        %v1093 = vmax.f32 %v1091, %v1092
        %v1094 = vsub.f32 %v1079, %v1040
        %v1095 = vsub.f32 %v1086, %v1047
        %v1096 = vsub.f32 %v1093, %v1054
        %v1097 = vmax.f32 %v1094, 1e-12
        %v1098 = vmax.f32 %v1095, 1e-12
        %v1099 = vmax.f32 %v1096, 1e-12
        %v1100 = vrcp.pop %v1097
        %v1101 = vrcp.pop %v1098
        %v1102 = vrcp.pop %v1099
        %vm1103 = vcmp.gt.f32.partialorder %v1079, %v1040
        %vm1104 = vcmp.gt.f32.partialorder %v1086, %v1047
        %vm1105 = vcmp.gt.f32.partialorder %v1093, %v1054
        %v1106 = vsub.f32 %v1010, %v1040
        %v1107 = vsub.f32 %v1011, %v1040
        %v1108 = vsub.f32 %v1012, %v1047
        %v1109 = vsub.f32 %v1013, %v1047
        %v1110 = vsub.f32 %v1014, %v1054
        %v1111 = vsub.f32 %v1015, %v1054
        %v1112 = vmul.f32 %v1106, %v1100
        %v1113 = vmul.f32 %v1107, %v1100
        %v1114 = vmul.f32 %v1108, %v1101
        %v1115 = vmul.f32 %v1109, %v1101
        %v1116 = vmul.f32 %v1110, %v1102
        %v1117 = vmul.f32 %v1111, %v1102
        %v1118 = vmax.f32 %v1112, 0.0
        %v1119 = vmax.f32 %v1113, 0.0
        %v1120 = vmax.f32 %v1114, 0.0
        %v1121 = vmax.f32 %v1115, 0.0
        %v1122 = vmax.f32 %v1116, 0.0
        %v1123 = vmax.f32 %v1117, 0.0
        %v1124 = vmin.f32 %v1118, 1.0
        %v1125 = vmin.f32 %v1119, 1.0
        %v1126 = vmin.f32 %v1120, 1.0
        %v1127 = vmin.f32 %v1121, 1.0
        %v1128 = vmin.f32 %v1122, 1.0
        %v1129 = vmin.f32 %v1123, 1.0
        %v1130 = vsel %vm1103, 1, 0
        %v1131 = vsel %vm1104, 1, 0
        %v1132 = vsel %vm1105, 1, 0
        %vm1133 = vcmp.eq.s32.totalorder %v1130, 1
        %vm1134 = vcmp.eq.s32.totalorder %v1131, 1
        %vm1135 = vcmp.eq.s32.totalorder %v1132, 1
        %v1136 = vsel %vm1133, %v1124, %v1010
        %v1137 = vsel %vm1133, %v1125, %v1011
        %v1138 = vsel %vm1134, %v1126, %v1012
        %v1139 = vsel %vm1134, %v1127, %v1013
        %v1140 = vsel %vm1135, %v1128, %v1014
        %v1141 = vsel %vm1135, %v1129, %v1015
        %1142 = vst.msk [vmem:[%s301] sm:$0xff] %vm340, %v1136
        %1143 = vst.msk [vmem:[%s301 + $0x8] sm:$0xff] %vm340, %v1137
        %1144 = vst.msk [vmem:[%s301 + $0x10] sm:$0xff] %vm340, %v1138
        %1145 = vst.msk [vmem:[%s301 + $0x18] sm:$0xff] %vm340, %v1139
        %1146 = vst.msk [vmem:[%s301 + $0x20] sm:$0xff] %vm340, %v1140
        %1147 = vst.msk [vmem:[%s301 + $0x28] sm:$0xff] %vm340, %v1141
        %s1148 = sand.u32 %s142, 1
        %s1149 = scalar_lea.sflag [#allocation4], %s1148
        %s1150 = sand.u32 %s142, 1
        %s1151 = smul.addr %s1150, 48
        %s1152 = scalar_lea.vmem [#allocation11], %s1151
        // Predicated region
        $region61: #{tpu_custom_call.1} parent=39 // pred_check
          %p1153 = pneg %p152
        $region62: #{tpu_custom_call.1} parent=39 // pred_check_branch
          %1155 = sbr.rel (%p1153) target = $region64
        $region63: #{tpu_custom_call.1} parent=39 // pred_region
          %s1156 = smul.u32 3, %s24
          %s1158 = ssub.s32 768, 768
          %1159 = vsyncadd %s1149, %s1158
          %s1160 = smul.addr %s1156, 2
          %s1161 = smul.addr %s1160, 128
          %s1162 = scalar_lea.hbm %s5, %s1161
          %s1163 = sshll.u32 %s1152, 4
          %s1164 = int_to_ptr.vmem [resolvable:$true] %s1163
          %1169 = dma.vmem_to_hbm [thread:$0]  %s1164, 768, %s1162, %s1149, 128, 128, 8
        $region64: #{tpu_custom_call.1} parent=39 // pred_fallthru
          _
      $region40: #{tpu_custom_call.1} parent=5 // pred_fallthru
        _
      %p1170 = scmp.le.s32.totalorder 2, %s19
      // Predicated region
      $region65: #{tpu_custom_call.1} parent=5 // pred_check
        %p1171 = pneg %p1170
      $region66: #{tpu_custom_call.1} parent=5 // pred_check_branch
        %1173 = sbr.rel (%p1171) target = $region68
      $region67: #{tpu_custom_call.1} parent=5 // pred_region
        %s1174 = ssub.s32 %s19, 2
        // Predicated region
        $region69: #{tpu_custom_call.1} parent=67 // pred_check
          %p1175 = pneg %p158
        $region70: #{tpu_custom_call.1} parent=67 // pred_check_branch
          %1177 = sbr.rel (%p1175) target = $region72
        $region71: #{tpu_custom_call.1} parent=67 // pred_region
          %s1178 = sand.u32 %s143, 1
          %s1179 = scalar_lea.sflag [#allocation4], %s1178
          %s1180 = sand.u32 %s143, 1
          %s1181 = smul.addr %s1180, 48
          %s1182 = scalar_lea.vmem [#allocation11], %s1181
          %1183 = dma.done %s1179, 768
        $region72: #{tpu_custom_call.1} parent=67 // pred_fallthru
          _
      $region68: #{tpu_custom_call.1} parent=5 // pred_fallthru
        _
    $region6: #{tpu_custom_call.1} parent=1 // loop_footer
      %s23 = sadd.s32 1, %s19
    $region7: #{tpu_custom_call.1} parent=1 // loop_footer_branch
      %18 = sbr.rel target = $region3
    $region8: #{tpu_custom_call.1} parent=1 // loop_exit
      _
    %1184 = vsyncpa [#allocation3], 1
    %s1185 = scalar_lea.sflag [#allocation3], 1
    %1186 = vsyncpa %s1185, 1
    %1187 = vsyncpa [#allocation6], 1
    %1188 = vsyncpa [#allocation9], 1
    %1189 = vsyncpa [#allocation4], 1
    %s1190 = scalar_lea.sflag [#allocation4], 1
    %1191 = vsyncpa %s1190, 1

// kernel: tpu_custom_call.1
$region0: #{tpu_custom_call.1}
  #allocation0 [shape = 'u32[]', space=smem, size = 0x4, offset = 0x4, fixed_abs, tag = 'smem constant byte address 0x4 - core index']
  #allocation1 [shape = 'u32[144,128]{1,0:T(1,128)}', space=vmem, size = 0x12000, scoped, tag = 'internal scratch']
  %s0 = inlined_call_operand.hbm [shape: bf16[6,16,16], index: 0, kind: input, shape index: {}]
  %s1 = inlined_call_operand.hbm [shape: bf16[16,16], index: 1, kind: input, shape index: {}]
  %s2 = inlined_call_operand.hbm [shape: bf16[16,16], index: 2, kind: input, shape index: {}]
  %s3 = inlined_call_operand.hbm [shape: bf16[16,16], index: 3, kind: input, shape index: {}]
  %s4 = inlined_call_operand.hbm [shape: bf16[16,16], index: 4, kind: input, shape index: {}]
  %s5 = inlined_call_operand.hbm [shape: f32[6,16,16], index: 5, kind: output, shape index: {}]
  %s6 = sld [smem:[#allocation0]]
  $region73: #{tpu_custom_call.1} parent=0
    _
  %s8 = ssub.s32 1, %s6
  %s9 = scalar_select 0, %s8, %s6
  $region1: #{tpu_custom_call.1} parent=0
    #allocation2 [shape = 'u8[24576]{0}', space=vmem, size = 0x6000, scoped, tag = 'input window, operand 0']
    #allocation3 [shape = 's32[2]{0}', space=sflag, size = 0x8, scoped, tag = 'scoped memory for tpu_custom_call.1']
    #allocation4 [shape = 's32[2]{0}', space=sflag, size = 0x8, scoped, tag = 'scoped memory for tpu_custom_call.1']
    #allocation5 [shape = 'u8[4096]{0}', space=vmem, size = 0x1000, scoped, tag = 'input window, operand 1, single buffered']
    #allocation6 [shape = 's32[1]{0}', space=sflag, size = 0x4, scoped, tag = 'scoped memory for tpu_custom_call.1']
    #allocation7 [shape = 'u8[4096]{0}', space=vmem, size = 0x1000, scoped, tag = 'input window, operand 2, single buffered']
    #allocation8 [shape = 'u8[4096]{0}', space=vmem, size = 0x1000, scoped, tag = 'input window, operand 3, single buffered']
    #allocation9 [shape = 's32[1]{0}', space=sflag, size = 0x4, scoped, tag = 'scoped memory for tpu_custom_call.1']
    #allocation10 [shape = 'u8[4096]{0}', space=vmem, size = 0x1000, scoped, tag = 'input window, operand 4, single buffered']
    #allocation11 [shape = 'u8[49152]{0}', space=vmem, size = 0xc000, scoped, tag = 'output window, operand 0']
    %10 = vsyncpa [#allocation3], 0
    %s11 = scalar_lea.sflag [#allocation3], 1
    %12 = vsyncpa %s11, 0
    %13 = vsyncpa [#allocation6], 0
    %14 = vsyncpa [#allocation9], 0
    %15 = vsyncpa [#allocation4], 0
    %s16 = scalar_lea.sflag [#allocation4], 1
    %17 = vsyncpa %s16, 0
    loop: start=0, step=1, limit=4
    $region2: #{tpu_custom_call.1} parent=1 // loop_pre_header
      _
    $region3: #{tpu_custom_call.1} parent=1 // loop_header
      %s19 = sphi 0, %s23
      %p20 = scmp.ge.s32.totalorder %s19, 4
      %s29 = sphi 0, %s31
      %s32 = sphi 0, %s29
      %s33 = sphi 0, %s32
      %s49 = sphi 0, %s33
      %s53 = sphi 0, %s53
      %s55 = sphi 0, %s53
      %s56 = sphi 0, %s55
      %s70 = sphi 0, %s56
      %s74 = sphi 0, %s74
      %s76 = sphi 0, %s74
      %s77 = sphi 0, %s76
      %s91 = sphi 0, %s77
      %s95 = sphi 0, %s95
      %s97 = sphi 0, %s95
      %s98 = sphi 0, %s97
      %s112 = sphi 0, %s98
      %s116 = sphi 0, %s116
      %s118 = sphi 0, %s116
      %s119 = sphi 0, %s118
      %s133 = sphi 0, %s119
      %s139 = sphi 0, %s141
      %s142 = sphi 0, %s139
      %s143 = sphi 0, %s142
      %s159 = sphi 0, %s143
    $region4: #{tpu_custom_call.1} parent=1 // loop_header_branch
      %22 = sbr.rel (%p20) target = $region8
    $region5: #{tpu_custom_call.1} parent=1 // loop_body
      %s24 = ssub.s32 %s19, 1
      %s25 = ssub.s32 %s19, 2
      %s26 = sadd.s32 %s19, 1
      %s27 = ssub.s32 %s19, %s26
      %p28 = scmp.eq.s32.totalorder %s27, 0
      %s30 = sadd.s32 %s29, 1
      %s31 = scalar_select %p28, %s29, %s30
      %p34 = pneg %p28
      %p35 = scmp.eq.s32.totalorder %s19, 1
      %p36 = por %p34, %p35
      %p37 = scmp.ne.s32.totalorder %s29, %s32
      %p38 = scmp.eq.s32.totalorder %s19, 0
      %p39 = por %p37, %p38
      %p40 = scmp.ne.s32.totalorder %s29, %s32
      %p41 = scmp.eq.s32.totalorder %s24, 1
      %p42 = por %p40, %p41
      %p43 = scmp.ne.s32.totalorder %s32, %s33
      %p44 = scmp.eq.s32.totalorder %s24, 0
      %p45 = por %p43, %p44
      %p46 = scmp.ne.s32.totalorder %s32, %s33
      %p47 = scmp.eq.s32.totalorder %s25, 1
      %p48 = por %p46, %p47
      %p50 = scmp.ne.s32.totalorder %s33, %s49
      %p51 = scmp.eq.s32.totalorder %s25, 0
      %p52 = por %p50, %p51
      %s54 = sadd.s32 %s53, 1
      %p57 = scmp.eq.s32.totalorder %s19, 1
      %p58 = scmp.ne.s32.totalorder %s53, %s55
      %p59 = scmp.eq.s32.totalorder %s19, 0
      %p60 = por %p58, %p59
      %p61 = scmp.ne.s32.totalorder %s53, %s55
      %p62 = scmp.eq.s32.totalorder %s24, 1
      %p63 = por %p61, %p62
      %p64 = scmp.ne.s32.totalorder %s55, %s56
      %p65 = scmp.eq.s32.totalorder %s24, 0
      %p66 = por %p64, %p65
      %p67 = scmp.ne.s32.totalorder %s55, %s56
      %p68 = scmp.eq.s32.totalorder %s25, 1
      %p69 = por %p67, %p68
      %p71 = scmp.ne.s32.totalorder %s56, %s70
      %p72 = scmp.eq.s32.totalorder %s25, 0
      %p73 = por %p71, %p72
      %s75 = sadd.s32 %s74, 1
      %p78 = scmp.eq.s32.totalorder %s19, 1
      %p79 = scmp.ne.s32.totalorder %s74, %s76
      %p80 = scmp.eq.s32.totalorder %s19, 0
      %p81 = por %p79, %p80
      %p82 = scmp.ne.s32.totalorder %s74, %s76
      %p83 = scmp.eq.s32.totalorder %s24, 1
      %p84 = por %p82, %p83
      %p85 = scmp.ne.s32.totalorder %s76, %s77
      %p86 = scmp.eq.s32.totalorder %s24, 0
      %p87 = por %p85, %p86
      %p88 = scmp.ne.s32.totalorder %s76, %s77
      %p89 = scmp.eq.s32.totalorder %s25, 1
      %p90 = por %p88, %p89
      %p92 = scmp.ne.s32.totalorder %s77, %s91
      %p93 = scmp.eq.s32.totalorder %s25, 0
      %p94 = por %p92, %p93
      %s96 = sadd.s32 %s95, 1
      %p99 = scmp.eq.s32.totalorder %s19, 1
      %p100 = scmp.ne.s32.totalorder %s95, %s97
      %p101 = scmp.eq.s32.totalorder %s19, 0
      %p102 = por %p100, %p101
      %p103 = scmp.ne.s32.totalorder %s95, %s97
      %p104 = scmp.eq.s32.totalorder %s24, 1
      %p105 = por %p103, %p104
      %p106 = scmp.ne.s32.totalorder %s97, %s98
      %p107 = scmp.eq.s32.totalorder %s24, 0
      %p108 = por %p106, %p107
      %p109 = scmp.ne.s32.totalorder %s97, %s98
      %p110 = scmp.eq.s32.totalorder %s25, 1
      %p111 = por %p109, %p110
      %p113 = scmp.ne.s32.totalorder %s98, %s112
      %p114 = scmp.eq.s32.totalorder %s25, 0
      %p115 = por %p113, %p114
      %s117 = sadd.s32 %s116, 1
      %p120 = scmp.eq.s32.totalorder %s19, 1
      %p121 = scmp.ne.s32.totalorder %s116, %s118
      %p122 = scmp.eq.s32.totalorder %s19, 0
      %p123 = por %p121, %p122
      %p124 = scmp.ne.s32.totalorder %s116, %s118
      %p125 = scmp.eq.s32.totalorder %s24, 1
      %p126 = por %p124, %p125
      %p127 = scmp.ne.s32.totalorder %s118, %s119
      %p128 = scmp.eq.s32.totalorder %s24, 0
      %p129 = por %p127, %p128
      %p130 = scmp.ne.s32.totalorder %s118, %s119
      %p131 = scmp.eq.s32.totalorder %s25, 1
      %p132 = por %p130, %p131
      %p134 = scmp.ne.s32.totalorder %s119, %s133
      %p135 = scmp.eq.s32.totalorder %s25, 0
      %p136 = por %p134, %p135
      %s137 = ssub.s32 %s19, %s26
      %p138 = scmp.eq.s32.totalorder %s137, 0
      %s140 = sadd.s32 %s139, 1
      %s141 = scalar_select %p138, %s139, %s140
      %p144 = pneg %p138
      %p145 = scmp.eq.s32.totalorder %s19, 1
      %p146 = por %p144, %p145
      %p147 = scmp.ne.s32.totalorder %s139, %s142
      %p148 = scmp.eq.s32.totalorder %s19, 0
      %p149 = por %p147, %p148
      %p150 = scmp.ne.s32.totalorder %s139, %s142
      %p151 = scmp.eq.s32.totalorder %s24, 1
      %p152 = por %p150, %p151
      %p153 = scmp.ne.s32.totalorder %s142, %s143
      %p154 = scmp.eq.s32.totalorder %s24, 0
      %p155 = por %p153, %p154
      %p156 = scmp.ne.s32.totalorder %s142, %s143
      %p157 = scmp.eq.s32.totalorder %s25, 1
      %p158 = por %p156, %p157
      %p160 = scmp.ne.s32.totalorder %s143, %s159
      %p161 = scmp.eq.s32.totalorder %s25, 0
      %p162 = por %p160, %p161
      %p163 = scmp.le.s32.totalorder 1, %s19
      %p164 = scmp.lt.s32.totalorder %s19, 3
      %p165 = pnand %p163, %p164
      %p166 = pneg %p165
      // Predicated region
      $region9: #{tpu_custom_call.1} parent=5 // pred_check
        _
      $region10: #{tpu_custom_call.1} parent=5 // pred_check_branch
        %168 = sbr.rel (%p165) target = $region12
      $region11: #{tpu_custom_call.1} parent=5 // pred_region
        %s169 = ssub.s32 %s19, 1
        // Predicated region
        $region13: #{tpu_custom_call.1} parent=11 // pred_check
          %p170 = pneg %p66
        $region14: #{tpu_custom_call.1} parent=11 // pred_check_branch
          %172 = sbr.rel (%p170) target = $region16
        $region15: #{tpu_custom_call.1} parent=11 // pred_region
          %s174 = ssub.s32 128, 128
          %175 = vsyncadd [#allocation6], %s174
          %s176 = sshll.u32 [#allocation5], 4
          %s177 = int_to_ptr.vmem [resolvable:$true] %s176
          %182 = dma.hbm_to_vmem [thread:$0]  %s1, 128, %s177, [#allocation6], 64, 64, 4
        $region16: #{tpu_custom_call.1} parent=11 // pred_fallthru
          _
        // Predicated region
        $region17: #{tpu_custom_call.1} parent=11 // pred_check
          %p183 = pneg %p87
        $region18: #{tpu_custom_call.1} parent=11 // pred_check_branch
          %185 = sbr.rel (%p183) target = $region20
        $region19: #{tpu_custom_call.1} parent=11 // pred_region
          %s187 = ssub.s32 128, 128
          %188 = vsyncadd [#allocation6], %s187
          %s189 = sshll.u32 [#allocation7], 4
          %s190 = int_to_ptr.vmem [resolvable:$true] %s189
          %195 = dma.hbm_to_vmem [thread:$0]  %s2, 128, %s190, [#allocation6], 64, 64, 4
        $region20: #{tpu_custom_call.1} parent=11 // pred_fallthru
          _
        // Predicated region
        $region21: #{tpu_custom_call.1} parent=11 // pred_check
          %p196 = pneg %p108
        $region22: #{tpu_custom_call.1} parent=11 // pred_check_branch
          %198 = sbr.rel (%p196) target = $region24
        $region23: #{tpu_custom_call.1} parent=11 // pred_region
          %s200 = ssub.s32 128, 128
          %201 = vsyncadd [#allocation9], %s200
          %s202 = sshll.u32 [#allocation8], 4
          %s203 = int_to_ptr.vmem [resolvable:$true] %s202
          %208 = dma.hbm_to_vmem [thread:$0]  %s3, 128, %s203, [#allocation9], 64, 64, 4
        $region24: #{tpu_custom_call.1} parent=11 // pred_fallthru
          _
        // Predicated region
        $region25: #{tpu_custom_call.1} parent=11 // pred_check
          %p209 = pneg %p129
        $region26: #{tpu_custom_call.1} parent=11 // pred_check_branch
          %211 = sbr.rel (%p209) target = $region28
        $region27: #{tpu_custom_call.1} parent=11 // pred_region
          %s213 = ssub.s32 128, 128
          %214 = vsyncadd [#allocation9], %s213
          %s215 = sshll.u32 [#allocation10], 4
          %s216 = int_to_ptr.vmem [resolvable:$true] %s215
          %221 = dma.hbm_to_vmem [thread:$0]  %s4, 128, %s216, [#allocation9], 64, 64, 4
        $region28: #{tpu_custom_call.1} parent=11 // pred_fallthru
          _
      $region12: #{tpu_custom_call.1} parent=5 // pred_fallthru
        _
      %p222 = scmp.lt.s32.totalorder %s19, 2
      // Predicated region
      $region29: #{tpu_custom_call.1} parent=5 // pred_check
        %p223 = pneg %p222
      $region30: #{tpu_custom_call.1} parent=5 // pred_check_branch
        %225 = sbr.rel (%p223) target = $region32
      $region31: #{tpu_custom_call.1} parent=5 // pred_region
        // Predicated region
        $region33: #{tpu_custom_call.1} parent=31 // pred_check
          %p226 = pneg %p39
        $region34: #{tpu_custom_call.1} parent=31 // pred_check_branch
          %228 = sbr.rel (%p226) target = $region36
        $region35: #{tpu_custom_call.1} parent=31 // pred_region
          %s229 = sand.u32 %s29, 1
          %s230 = scalar_lea.sflag [#allocation3], %s229
          %s231 = sand.u32 %s29, 1
          %s232 = smul.addr %s231, 24
          %s233 = scalar_lea.vmem [#allocation2], %s232
          %s234 = smul.u32 3, %s19
          %s236 = ssub.s32 384, 384
          %237 = vsyncadd %s230, %s236
          %s238 = smul.addr %s234, 2
          %s239 = smul.addr %s238, 64
          %s240 = scalar_lea.hbm %s0, %s239
          %s241 = sshll.u32 %s233, 4
          %s242 = int_to_ptr.vmem [resolvable:$true] %s241
          %247 = dma.hbm_to_vmem [thread:$0]  %s240, 384, %s242, %s230, 64, 64, 4
        $region36: #{tpu_custom_call.1} parent=31 // pred_fallthru
          _
      $region32: #{tpu_custom_call.1} parent=5 // pred_fallthru
        _
      %p248 = scmp.le.s32.totalorder 1, %s19
      %p249 = scmp.lt.s32.totalorder %s19, 3
      %p250 = pnand %p248, %p249
      %p251 = pneg %p250
      // Predicated region
      $region37: #{tpu_custom_call.1} parent=5 // pred_check
        _
      $region38: #{tpu_custom_call.1} parent=5 // pred_check_branch
        %253 = sbr.rel (%p250) target = $region40
      $region39: #{tpu_custom_call.1} parent=5 // pred_region
        %s254 = ssub.s32 %s19, 1
        %s255 = sand.u32 %s32, 1
        %s256 = scalar_lea.sflag [#allocation3], %s255
        %s257 = sand.u32 %s32, 1
        %s258 = smul.addr %s257, 24
        %s259 = scalar_lea.vmem [#allocation2], %s258
        // Predicated region
        $region41: #{tpu_custom_call.1} parent=39 // pred_check
          %p260 = pneg %p45
        $region42: #{tpu_custom_call.1} parent=39 // pred_check_branch
          %262 = sbr.rel (%p260) target = $region44
        $region43: #{tpu_custom_call.1} parent=39 // pred_region
          %263 = dma.done %s256, 384
        $region44: #{tpu_custom_call.1} parent=39 // pred_fallthru
          _
        // Predicated region
        $region45: #{tpu_custom_call.1} parent=39 // pred_check
          %p264 = pneg %p66
        $region46: #{tpu_custom_call.1} parent=39 // pred_check_branch
          %266 = sbr.rel (%p264) target = $region48
        $region47: #{tpu_custom_call.1} parent=39 // pred_region
          %267 = dma.done [#allocation6], 128
        $region48: #{tpu_custom_call.1} parent=39 // pred_fallthru
          _
        // Predicated region
        $region49: #{tpu_custom_call.1} parent=39 // pred_check
          %p268 = pneg %p87
        $region50: #{tpu_custom_call.1} parent=39 // pred_check_branch
          %270 = sbr.rel (%p268) target = $region52
        $region51: #{tpu_custom_call.1} parent=39 // pred_region
          %271 = dma.done [#allocation6], 128
        $region52: #{tpu_custom_call.1} parent=39 // pred_fallthru
          _
        // Predicated region
        $region53: #{tpu_custom_call.1} parent=39 // pred_check
          %p272 = pneg %p108
        $region54: #{tpu_custom_call.1} parent=39 // pred_check_branch
          %274 = sbr.rel (%p272) target = $region56
        $region55: #{tpu_custom_call.1} parent=39 // pred_region
          %275 = dma.done [#allocation9], 128
        $region56: #{tpu_custom_call.1} parent=39 // pred_fallthru
          _
        // Predicated region
        $region57: #{tpu_custom_call.1} parent=39 // pred_check
          %p276 = pneg %p129
        $region58: #{tpu_custom_call.1} parent=39 // pred_check_branch
          %278 = sbr.rel (%p276) target = $region60
        $region59: #{tpu_custom_call.1} parent=39 // pred_region
          %279 = dma.done [#allocation9], 128
        $region60: #{tpu_custom_call.1} parent=39 // pred_fallthru
          _
        %s280 = sand.u32 %s32, 1
        %s281 = scalar_lea.sflag [#allocation3], %s280
        %s282 = sand.u32 %s32, 1
        %s283 = smul.addr %s282, 24
        %s284 = scalar_lea.vmem [#allocation2], %s283
        %p285 = pneg %p45
        %p286 = pneg %p42
        %p287 = pneg %p66
        %p288 = pneg %p63
        %p289 = pneg %p87
        %p290 = pneg %p84
        %p291 = pneg %p108
        %p292 = pneg %p105
        %p293 = pneg %p129
        %p294 = pneg %p126
        %p295 = pneg %p155
        %p296 = pneg %p152
        %s297 = sand.u32 %s142, 1
        %s298 = scalar_lea.sflag [#allocation4], %s297
        %s299 = sand.u32 %s142, 1
        %s300 = smul.addr %s299, 48
        %s301 = scalar_lea.vmem [#allocation11], %s300
        %s302 = smul.u32 3, %s24
        %s303 = smul.u32 3, %s24
        %v305 = vld [vmem:[%s259] sm:$0xf]
        %v306 = vld [vmem:[%s259 + $0x4] sm:$0xf]
        %v307 = vld [vmem:[%s259 + $0x8] sm:$0xf]
        %v308 = vld [vmem:[%s259 + $0xc] sm:$0xf]
        %v309 = vld [vmem:[%s259 + $0x10] sm:$0xf]
        %v310 = vld [vmem:[%s259 + $0x14] sm:$0xf]
        %v311 = vld [vmem:[#allocation7] sm:$0xf]
        %v312 = vld [vmem:[#allocation7 + $0x4] sm:$0xf]
        %v313 = vld [vmem:[#allocation10] sm:$0xf]
        %v314 = vld [vmem:[#allocation10 + $0x4] sm:$0xf]
        %v315 = vld [vmem:[#allocation5] sm:$0xf]
        %v316 = vld [vmem:[#allocation5 + $0x4] sm:$0xf]
        %v317 = vld [vmem:[#allocation8] sm:$0xf]
        %v318 = vld [vmem:[#allocation8 + $0x4] sm:$0xf]
        %v325 = vunpack.c.l.b16 %v305
        %v326 = vunpack.c.l.b16 %v306
        %v327 = vunpack.c.l.b16 %v307
        %v328 = vunpack.c.l.b16 %v308
        %v329 = vunpack.c.l.b16 %v309
        %v330 = vunpack.c.l.b16 %v310
        %v331 = vpack.c.b16 %v326, %v325
        %v332 = vpack.c.b16 %v328, %v327
        %v333 = vpack.c.b16 %v330, %v329
        %v336 = vunpack.c.l.b16 %v311
        %v337 = vunpack.c.l.b16 %v312
        %v338 = vpack.c.b16 %v337, %v336
        %vm340 = vcmask 130048
        %v342 = vsel %vm340, %v331, 0
        %v345 = vsel %vm340, %v332, 0
        %v348 = vsel %vm340, %v333, 0
        %350 = vmatprep.subr.bf16.mxu0 0
        %351 = vmatpush1.bf16.msra.mxu0 0
        %352 = vmatprep.subr.bf16.mxu0 0
        %353 = vmatpush1.bf16.msra.mxu0 0
        %354 = vmatprep.subr.bf16.mxu0 0
        %355 = vmatpush1.bf16.msra.mxu0 0
        %356 = vmatprep.subr.bf16.mxu0 0
        %357 = vmatpush1.bf16.msra.mxu0 0
        %358 = vmatprep.subr.bf16.mxu0 0
        %359 = vmatpush1.bf16.msra.mxu0 0
        %360 = vmatprep.subr.bf16.mxu0 0
        %361 = vmatpush1.bf16.msra.mxu0 0
        %362 = vmatprep.subr.bf16.mxu0 0
        %363 = vmatpush1.bf16.msra.mxu0 0
        %364 = vmatprep.subr.bf16.mxu0 0
        %365 = vmatpush1.bf16.msra.mxu0 %v338
        %366 = vmatprep.subr.bf16.mxu0 0
        %367 = vmatpush2.bf16.msra.mxu0 0
        %368 = vmatprep.subr.bf16.mxu0 0
        %369 = vmatpush2.bf16.msra.mxu0 0
        %370 = vmatprep.subr.bf16.mxu0 0
        %371 = vmatpush2.bf16.msra.mxu0 0
        %372 = vmatprep.subr.bf16.mxu0 0
        %373 = vmatpush2.bf16.msra.mxu0 0
        %374 = vmatprep.subr.bf16.mxu0 0
        %375 = vmatpush2.bf16.msra.mxu0 0
        %376 = vmatprep.subr.bf16.mxu0 0
        %377 = vmatpush2.bf16.msra.mxu0 0
        %378 = vmatprep.subr.bf16.mxu0 0
        %379 = vmatpush2.bf16.msra.mxu0 0
        %380 = vmatprep.subr.bf16.mxu0 0
        %381 = vmatpush2.bf16.msra.mxu0 0
        %382 = vmatprep.mubr.bf16.mxu0 0
        %383 = vmatmul.mubr.bf16.gmra.mxu0 %v342
        %v384 = vpop.f32.mrf.mxu0
        %v385 = vadd.f32 0.0, %v384
        %v386 = vpop.f32.mrf.mxu0
        %v387 = vpop.f32.mrf.mxu0
        %v388 = vadd.f32 0.0, %v387
        %v389 = vpop.f32.mrf.mxu0
        %390 = vmatprep.mubr.bf16.mxu0 0
        %391 = vmatmul.mubr.bf16.gmra.mxu0 %v345
        %v392 = vpop.f32.mrf.mxu0
        %v393 = vadd.f32 0.0, %v392
        %v394 = vpop.f32.mrf.mxu0
        %v395 = vpop.f32.mrf.mxu0
        %v396 = vadd.f32 0.0, %v395
        %v397 = vpop.f32.mrf.mxu0
        %398 = vmatprep.mubr.bf16.mxu0 0
        %399 = vmatmul.mubr.bf16.gmra.mxu0 %v348
        %v400 = vpop.f32.mrf.mxu0
        %v401 = vadd.f32 0.0, %v400
        %v402 = vpop.f32.mrf.mxu0
        %v403 = vpop.f32.mrf.mxu0
        %v404 = vadd.f32 0.0, %v403
        %v405 = vpop.f32.mrf.mxu0
        %406 = vdwg.mxu0
        %v407 = vpack.c.bf16 %v388, %v385
        %v408 = vpack.c.bf16 %v396, %v393
        %v409 = vpack.c.bf16 %v404, %v401
        %v412 = vunpack.c.l.b16 %v315
        %v413 = vunpack.c.l.b16 %v316
        %v414 = vpack.c.b16 %v413, %v412
        %v416 = vsel %vm340, %v414, 0
        %418 = vmatprep.subr.bf16.mxu0 0
        %419 = vmatpush1.bf16.msra.mxu0 0
        %420 = vmatprep.subr.bf16.mxu0 0
        %421 = vmatpush1.bf16.msra.mxu0 0
        %422 = vmatprep.subr.bf16.mxu0 0
        %423 = vmatpush1.bf16.msra.mxu0 0
        %424 = vmatprep.subr.bf16.mxu0 0
        %425 = vmatpush1.bf16.msra.mxu0 0
        %426 = vmatprep.subr.bf16.mxu0 0
        %427 = vmatpush1.bf16.msra.mxu0 0
        %428 = vmatprep.subr.bf16.mxu0 0
        %429 = vmatpush1.bf16.msra.mxu0 0
        %430 = vmatprep.subr.bf16.mxu0 0
        %431 = vmatpush1.bf16.msra.mxu0 0
        %432 = vmatprep.subr.bf16.mxu0 0
        %433 = vmatpush1.bf16.msra.mxu0 %v407
        %434 = vmatprep.subr.bf16.mxu0 0
        %435 = vmatpush2.bf16.msra.mxu0 0
        %436 = vmatprep.subr.bf16.mxu0 0
        %437 = vmatpush2.bf16.msra.mxu0 0
        %438 = vmatprep.subr.bf16.mxu0 0
        %439 = vmatpush2.bf16.msra.mxu0 0
        %440 = vmatprep.subr.bf16.mxu0 0
        %441 = vmatpush2.bf16.msra.mxu0 0
        %442 = vmatprep.subr.bf16.mxu0 0
        %443 = vmatpush2.bf16.msra.mxu0 0
        %444 = vmatprep.subr.bf16.mxu0 0
        %445 = vmatpush2.bf16.msra.mxu0 0
        %446 = vmatprep.subr.bf16.mxu0 0
        %447 = vmatpush2.bf16.msra.mxu0 0
        %448 = vmatprep.subr.bf16.mxu0 0
        %449 = vmatpush2.bf16.msra.mxu0 0
        %450 = vmatprep.mubr.bf16.mxu0 0
        %451 = vmatmul.mubr.bf16.gmra.mxu0 %v416
        %v452 = vpop.f32.mrf.mxu0
        %v453 = vadd.f32 0.0, %v452
        %v454 = vpop.f32.mrf.mxu0
        %v455 = vpop.f32.mrf.mxu0
        %v456 = vadd.f32 0.0, %v455
        %v457 = vpop.f32.mrf.mxu0
        %458 = vdwg.mxu0
        %459 = vmatprep.subr.bf16.mxu0 0
        %460 = vmatpush1.bf16.msra.mxu0 0
        %461 = vmatprep.subr.bf16.mxu0 0
        %462 = vmatpush1.bf16.msra.mxu0 0
        %463 = vmatprep.subr.bf16.mxu0 0
        %464 = vmatpush1.bf16.msra.mxu0 0
        %465 = vmatprep.subr.bf16.mxu0 0
        %466 = vmatpush1.bf16.msra.mxu0 0
        %467 = vmatprep.subr.bf16.mxu0 0
        %468 = vmatpush1.bf16.msra.mxu0 0
        %469 = vmatprep.subr.bf16.mxu0 0
        %470 = vmatpush1.bf16.msra.mxu0 0
        %471 = vmatprep.subr.bf16.mxu0 0
        %472 = vmatpush1.bf16.msra.mxu0 0
        %473 = vmatprep.subr.bf16.mxu0 0
        %474 = vmatpush1.bf16.msra.mxu0 %v408
        %475 = vmatprep.subr.bf16.mxu0 0
        %476 = vmatpush2.bf16.msra.mxu0 0
        %477 = vmatprep.subr.bf16.mxu0 0
        %478 = vmatpush2.bf16.msra.mxu0 0
        %479 = vmatprep.subr.bf16.mxu0 0
        %480 = vmatpush2.bf16.msra.mxu0 0
        %481 = vmatprep.subr.bf16.mxu0 0
        %482 = vmatpush2.bf16.msra.mxu0 0
        %483 = vmatprep.subr.bf16.mxu0 0
        %484 = vmatpush2.bf16.msra.mxu0 0
        %485 = vmatprep.subr.bf16.mxu0 0
        %486 = vmatpush2.bf16.msra.mxu0 0
        %487 = vmatprep.subr.bf16.mxu0 0
        %488 = vmatpush2.bf16.msra.mxu0 0
        %489 = vmatprep.subr.bf16.mxu0 0
        %490 = vmatpush2.bf16.msra.mxu0 0
        %491 = vmatprep.mubr.bf16.mxu0 0
        %492 = vmatmul.mubr.bf16.gmra.mxu0 %v416
        %v493 = vpop.f32.mrf.mxu0
        %v494 = vadd.f32 0.0, %v493
        %v495 = vpop.f32.mrf.mxu0
        %v496 = vpop.f32.mrf.mxu0
        %v497 = vadd.f32 0.0, %v496
        %v498 = vpop.f32.mrf.mxu0
        %499 = vdwg.mxu0
        %500 = vmatprep.subr.bf16.mxu0 0
        %501 = vmatpush1.bf16.msra.mxu0 0
        %502 = vmatprep.subr.bf16.mxu0 0
        %503 = vmatpush1.bf16.msra.mxu0 0
        %504 = vmatprep.subr.bf16.mxu0 0
        %505 = vmatpush1.bf16.msra.mxu0 0
        %506 = vmatprep.subr.bf16.mxu0 0
        %507 = vmatpush1.bf16.msra.mxu0 0
        %508 = vmatprep.subr.bf16.mxu0 0
        %509 = vmatpush1.bf16.msra.mxu0 0
        %510 = vmatprep.subr.bf16.mxu0 0
        %511 = vmatpush1.bf16.msra.mxu0 0
        %512 = vmatprep.subr.bf16.mxu0 0
        %513 = vmatpush1.bf16.msra.mxu0 0
        %514 = vmatprep.subr.bf16.mxu0 0
        %515 = vmatpush1.bf16.msra.mxu0 %v409
        %516 = vmatprep.subr.bf16.mxu0 0
        %517 = vmatpush2.bf16.msra.mxu0 0
        %518 = vmatprep.subr.bf16.mxu0 0
        %519 = vmatpush2.bf16.msra.mxu0 0
        %520 = vmatprep.subr.bf16.mxu0 0
        %521 = vmatpush2.bf16.msra.mxu0 0
        %522 = vmatprep.subr.bf16.mxu0 0
        %523 = vmatpush2.bf16.msra.mxu0 0
        %524 = vmatprep.subr.bf16.mxu0 0
        %525 = vmatpush2.bf16.msra.mxu0 0
        %526 = vmatprep.subr.bf16.mxu0 0
        %527 = vmatpush2.bf16.msra.mxu0 0
        %528 = vmatprep.subr.bf16.mxu0 0
        %529 = vmatpush2.bf16.msra.mxu0 0
        %530 = vmatprep.subr.bf16.mxu0 0
        %531 = vmatpush2.bf16.msra.mxu0 0
        %532 = vmatprep.mubr.bf16.mxu0 0
        %533 = vmatmul.mubr.bf16.gmra.mxu0 %v416
        %v534 = vpop.f32.mrf.mxu0
        %v535 = vadd.f32 0.0, %v534
        %v536 = vpop.f32.mrf.mxu0
        %v537 = vpop.f32.mrf.mxu0
        %v538 = vadd.f32 0.0, %v537
        %v539 = vpop.f32.mrf.mxu0
        %540 = vdwg.mxu0
        %v541 = vmul.f32 %v453, 1.25
        %v542 = vmul.f32 %v456, 1.25
        %v543 = vmul.f32 %v494, 1.25
        %v544 = vmul.f32 %v497, 1.25
        %v545 = vmul.f32 %v535, 1.25
        %v546 = vmul.f32 %v538, 1.25
        %v547 = vmax.f32 %v541, 0.0
        %v548 = vmax.f32 %v542, 0.0
        %v549 = vmax.f32 %v543, 0.0
        %v550 = vmax.f32 %v544, 0.0
        %v551 = vmax.f32 %v545, 0.0
        %v552 = vmax.f32 %v546, 0.0
        %v553 = vmin.f32 %v547, 1.0
        %v554 = vmin.f32 %v548, 1.0
        %v555 = vmin.f32 %v549, 1.0
        %v556 = vmin.f32 %v550, 1.0
        %v557 = vmin.f32 %v551, 1.0
        %v558 = vmin.f32 %v552, 1.0
        %v559 = vpack.c.bf16 %v554, %v553
        %v560 = vpack.c.bf16 %v556, %v555
        %v561 = vpack.c.bf16 %v558, %v557
        %v564 = vunpack.c.l.b16 %v317
        %v565 = vunpack.c.l.b16 %v318
        %v566 = vpack.c.b16 %v565, %v564
        %v568 = vsel %vm340, %v566, 0
        %570 = vmatprep.subr.bf16.mxu0 0
        %571 = vmatpush1.bf16.msra.mxu0 0
        %572 = vmatprep.subr.bf16.mxu0 0
        %573 = vmatpush1.bf16.msra.mxu0 0
        %574 = vmatprep.subr.bf16.mxu0 0
        %575 = vmatpush1.bf16.msra.mxu0 0
        %576 = vmatprep.subr.bf16.mxu0 0
        %577 = vmatpush1.bf16.msra.mxu0 0
        %578 = vmatprep.subr.bf16.mxu0 0
        %579 = vmatpush1.bf16.msra.mxu0 0
        %580 = vmatprep.subr.bf16.mxu0 0
        %581 = vmatpush1.bf16.msra.mxu0 0
        %582 = vmatprep.subr.bf16.mxu0 0
        %583 = vmatpush1.bf16.msra.mxu0 0
        %584 = vmatprep.subr.bf16.mxu0 0
        %585 = vmatpush1.bf16.msra.mxu0 %v559
        %586 = vmatprep.subr.bf16.mxu0 0
        %587 = vmatpush2.bf16.msra.mxu0 0
        %588 = vmatprep.subr.bf16.mxu0 0
        %589 = vmatpush2.bf16.msra.mxu0 0
        %590 = vmatprep.subr.bf16.mxu0 0
        %591 = vmatpush2.bf16.msra.mxu0 0
        %592 = vmatprep.subr.bf16.mxu0 0
        %593 = vmatpush2.bf16.msra.mxu0 0
        %594 = vmatprep.subr.bf16.mxu0 0
        %595 = vmatpush2.bf16.msra.mxu0 0
        %596 = vmatprep.subr.bf16.mxu0 0
        %597 = vmatpush2.bf16.msra.mxu0 0
        %598 = vmatprep.subr.bf16.mxu0 0
        %599 = vmatpush2.bf16.msra.mxu0 0
        %600 = vmatprep.subr.bf16.mxu0 0
        %601 = vmatpush2.bf16.msra.mxu0 0
        %602 = vmatprep.mubr.bf16.mxu0 0
        %603 = vmatmul.mubr.bf16.gmra.mxu0 %v568
        %v604 = vpop.f32.mrf.mxu0
        %v605 = vadd.f32 0.0, %v604
        %v606 = vpop.f32.mrf.mxu0
        %v607 = vpop.f32.mrf.mxu0
        %v608 = vadd.f32 0.0, %v607
        %v609 = vpop.f32.mrf.mxu0
        %610 = vdwg.mxu0
        %611 = vmatprep.subr.bf16.mxu0 0
        %612 = vmatpush1.bf16.msra.mxu0 0
        %613 = vmatprep.subr.bf16.mxu0 0
        %614 = vmatpush1.bf16.msra.mxu0 0
        %615 = vmatprep.subr.bf16.mxu0 0
        %616 = vmatpush1.bf16.msra.mxu0 0
        %617 = vmatprep.subr.bf16.mxu0 0
        %618 = vmatpush1.bf16.msra.mxu0 0
        %619 = vmatprep.subr.bf16.mxu0 0
        %620 = vmatpush1.bf16.msra.mxu0 0
        %621 = vmatprep.subr.bf16.mxu0 0
        %622 = vmatpush1.bf16.msra.mxu0 0
        %623 = vmatprep.subr.bf16.mxu0 0
        %624 = vmatpush1.bf16.msra.mxu0 0
        %625 = vmatprep.subr.bf16.mxu0 0
        %626 = vmatpush1.bf16.msra.mxu0 %v560
        %627 = vmatprep.subr.bf16.mxu0 0
        %628 = vmatpush2.bf16.msra.mxu0 0
        %629 = vmatprep.subr.bf16.mxu0 0
        %630 = vmatpush2.bf16.msra.mxu0 0
        %631 = vmatprep.subr.bf16.mxu0 0
        %632 = vmatpush2.bf16.msra.mxu0 0
        %633 = vmatprep.subr.bf16.mxu0 0
        %634 = vmatpush2.bf16.msra.mxu0 0
        %635 = vmatprep.subr.bf16.mxu0 0
        %636 = vmatpush2.bf16.msra.mxu0 0
        %637 = vmatprep.subr.bf16.mxu0 0
        %638 = vmatpush2.bf16.msra.mxu0 0
        %639 = vmatprep.subr.bf16.mxu0 0
        %640 = vmatpush2.bf16.msra.mxu0 0
        %641 = vmatprep.subr.bf16.mxu0 0
        %642 = vmatpush2.bf16.msra.mxu0 0
        %643 = vmatprep.mubr.bf16.mxu0 0
        %644 = vmatmul.mubr.bf16.gmra.mxu0 %v568
        %v645 = vpop.f32.mrf.mxu0
        %v646 = vadd.f32 0.0, %v645
        %v647 = vpop.f32.mrf.mxu0
        %v648 = vpop.f32.mrf.mxu0
        %v649 = vadd.f32 0.0, %v648
        %v650 = vpop.f32.mrf.mxu0
        %651 = vdwg.mxu0
        %652 = vmatprep.subr.bf16.mxu0 0
        %653 = vmatpush1.bf16.msra.mxu0 0
        %654 = vmatprep.subr.bf16.mxu0 0
        %655 = vmatpush1.bf16.msra.mxu0 0
        %656 = vmatprep.subr.bf16.mxu0 0
        %657 = vmatpush1.bf16.msra.mxu0 0
        %658 = vmatprep.subr.bf16.mxu0 0
        %659 = vmatpush1.bf16.msra.mxu0 0
        %660 = vmatprep.subr.bf16.mxu0 0
        %661 = vmatpush1.bf16.msra.mxu0 0
        %662 = vmatprep.subr.bf16.mxu0 0
        %663 = vmatpush1.bf16.msra.mxu0 0
        %664 = vmatprep.subr.bf16.mxu0 0
        %665 = vmatpush1.bf16.msra.mxu0 0
        %666 = vmatprep.subr.bf16.mxu0 0
        %667 = vmatpush1.bf16.msra.mxu0 %v561
        %668 = vmatprep.subr.bf16.mxu0 0
        %669 = vmatpush2.bf16.msra.mxu0 0
        %670 = vmatprep.subr.bf16.mxu0 0
        %671 = vmatpush2.bf16.msra.mxu0 0
        %672 = vmatprep.subr.bf16.mxu0 0
        %673 = vmatpush2.bf16.msra.mxu0 0
        %674 = vmatprep.subr.bf16.mxu0 0
        %675 = vmatpush2.bf16.msra.mxu0 0
        %676 = vmatprep.subr.bf16.mxu0 0
        %677 = vmatpush2.bf16.msra.mxu0 0
        %678 = vmatprep.subr.bf16.mxu0 0
        %679 = vmatpush2.bf16.msra.mxu0 0
        %680 = vmatprep.subr.bf16.mxu0 0
        %681 = vmatpush2.bf16.msra.mxu0 0
        %682 = vmatprep.subr.bf16.mxu0 0
        %683 = vmatpush2.bf16.msra.mxu0 0
        %684 = vmatprep.mubr.bf16.mxu0 0
        %685 = vmatmul.mubr.bf16.gmra.mxu0 %v568
        %v686 = vpop.f32.mrf.mxu0
        %v687 = vadd.f32 0.0, %v686
        %v688 = vpop.f32.mrf.mxu0
        %v689 = vpop.f32.mrf.mxu0
        %v690 = vadd.f32 0.0, %v689
        %v691 = vpop.f32.mrf.mxu0
        %692 = vdwg.mxu0
        %v693 = vpack.c.bf16 %v608, %v605
        %v694 = vpack.c.bf16 %v649, %v646
        %v695 = vpack.c.bf16 %v690, %v687
        %v698 = vunpack.c.l.b16 %v313
        %v699 = vunpack.c.l.b16 %v314
        %v700 = vpack.c.b16 %v699, %v698
        %v703 = vsel %vm340, %v693, 0
        %v706 = vsel %vm340, %v694, 0
        %v709 = vsel %vm340, %v695, 0
        %711 = vmatprep.subr.bf16.mxu0 0
        %712 = vmatpush1.bf16.msra.mxu0 0
        %713 = vmatprep.subr.bf16.mxu0 0
        %714 = vmatpush1.bf16.msra.mxu0 0
        %715 = vmatprep.subr.bf16.mxu0 0
        %716 = vmatpush1.bf16.msra.mxu0 0
        %717 = vmatprep.subr.bf16.mxu0 0
        %718 = vmatpush1.bf16.msra.mxu0 0
        %719 = vmatprep.subr.bf16.mxu0 0
        %720 = vmatpush1.bf16.msra.mxu0 0
        %721 = vmatprep.subr.bf16.mxu0 0
        %722 = vmatpush1.bf16.msra.mxu0 0
        %723 = vmatprep.subr.bf16.mxu0 0
        %724 = vmatpush1.bf16.msra.mxu0 0
        %725 = vmatprep.subr.bf16.mxu0 0
        %726 = vmatpush1.bf16.msra.mxu0 %v700
        %727 = vmatprep.subr.bf16.mxu0 0
        %728 = vmatpush2.bf16.msra.mxu0 0
        %729 = vmatprep.subr.bf16.mxu0 0
        %730 = vmatpush2.bf16.msra.mxu0 0
        %731 = vmatprep.subr.bf16.mxu0 0
        %732 = vmatpush2.bf16.msra.mxu0 0
        %733 = vmatprep.subr.bf16.mxu0 0
        %734 = vmatpush2.bf16.msra.mxu0 0
        %735 = vmatprep.subr.bf16.mxu0 0
        %736 = vmatpush2.bf16.msra.mxu0 0
        %737 = vmatprep.subr.bf16.mxu0 0
        %738 = vmatpush2.bf16.msra.mxu0 0
        %739 = vmatprep.subr.bf16.mxu0 0
        %740 = vmatpush2.bf16.msra.mxu0 0
        %741 = vmatprep.subr.bf16.mxu0 0
        %742 = vmatpush2.bf16.msra.mxu0 0
        %743 = vmatprep.mubr.bf16.mxu0 0
        %744 = vmatmul.mubr.bf16.gmra.mxu0 %v703
        %v745 = vpop.f32.mrf.mxu0
        %v746 = vadd.f32 0.0, %v745
        %v747 = vpop.f32.mrf.mxu0
        %v748 = vpop.f32.mrf.mxu0
        %v749 = vadd.f32 0.0, %v748
        %v750 = vpop.f32.mrf.mxu0
        %751 = vmatprep.mubr.bf16.mxu0 0
        %752 = vmatmul.mubr.bf16.gmra.mxu0 %v706
        %v753 = vpop.f32.mrf.mxu0
        %v754 = vadd.f32 0.0, %v753
        %v755 = vpop.f32.mrf.mxu0
        %v756 = vpop.f32.mrf.mxu0
        %v757 = vadd.f32 0.0, %v756
        %v758 = vpop.f32.mrf.mxu0
        %759 = vmatprep.mubr.bf16.mxu0 0
        %760 = vmatmul.mubr.bf16.gmra.mxu0 %v709
        %v761 = vpop.f32.mrf.mxu0
        %v762 = vadd.f32 0.0, %v761
        %v763 = vpop.f32.mrf.mxu0
        %v764 = vpop.f32.mrf.mxu0
        %v765 = vadd.f32 0.0, %v764
        %v766 = vpop.f32.mrf.mxu0
        %767 = vdwg.mxu0
        %v768 = vsub.f32 1.0, %v746
        %v769 = vsub.f32 1.0, %v749
        %v770 = vsub.f32 1.0, %v754
        %v771 = vsub.f32 1.0, %v757
        %v772 = vsub.f32 1.0, %v762
        %v773 = vsub.f32 1.0, %v765
        %v774 = vmax.f32 %v768, 0.0
        %v775 = vmax.f32 %v769, 0.0
        %v776 = vmax.f32 %v770, 0.0
        %v777 = vmax.f32 %v771, 0.0
        %v778 = vmax.f32 %v772, 0.0
        %v779 = vmax.f32 %v773, 0.0
        %v780 = vmin.f32 %v774, 1.0
        %v781 = vmin.f32 %v775, 1.0
        %v782 = vmin.f32 %v776, 1.0
        %v783 = vmin.f32 %v777, 1.0
        %v784 = vmin.f32 %v778, 1.0
        %v785 = vmin.f32 %v779, 1.0
        %v786 = vmul.f32 %v780, 3.984375
        %v787 = vmul.f32 %v781, 3.984375
        %v788 = vmul.f32 %v782, 3.984375
        %v789 = vmul.f32 %v783, 3.984375
        %v790 = vmul.f32 %v784, 3.984375
        %v791 = vmul.f32 %v785, 3.984375
        %v792 = vfloor.f32 %v786
        %v793 = vfloor.f32 %v787
        %v794 = vfloor.f32 %v788
        %v795 = vfloor.f32 %v789
        %v796 = vfloor.f32 %v790
        %v797 = vfloor.f32 %v791
        %v798 = vmul.f32 %v792, 0.2509804
        %v799 = vmul.f32 %v793, 0.2509804
        %v800 = vmul.f32 %v794, 0.2509804
        %v801 = vmul.f32 %v795, 0.2509804
        %v802 = vmul.f32 %v796, 0.2509804
        %v803 = vmul.f32 %v797, 0.2509804
        %vm804 = vcmp.ge.f32.partialorder %v798, 0.7529412
        %vm805 = vcmp.ge.f32.partialorder %v799, 0.7529412
        %vm806 = vcmp.ge.f32.partialorder %v800, 0.7529412
        %vm807 = vcmp.ge.f32.partialorder %v801, 0.7529412
        %vm808 = vcmp.ge.f32.partialorder %v802, 0.7529412
        %vm809 = vcmp.ge.f32.partialorder %v803, 0.7529412
        %v810 = vsub.f32 1.0, %v798
        %v811 = vsub.f32 1.0, %v799
        %v812 = vsub.f32 1.0, %v800
        %v813 = vsub.f32 1.0, %v801
        %v814 = vsub.f32 1.0, %v802
        %v815 = vsub.f32 1.0, %v803
        %v816 = vsel %vm804, %v810, %v798
        %v817 = vsel %vm805, %v811, %v799
        %v818 = vsel %vm806, %v812, %v800
        %v819 = vsel %vm807, %v813, %v801
        %v820 = vsel %vm808, %v814, %v802
        %v821 = vsel %vm809, %v815, %v803
        %v822 = vlaneseq
        %v823 = vshrl.u32 %v822, 7
        %v824 = vadd.s32 %v823, 8
        %v825 = vlaneseq
        %v826 = vand.u32 %v825, 127
        %vm827 = vcmp.gt.s32.totalorder %v823, 0
        %vm828 = vcmp.gt.s32.totalorder %v824, 0
        %vm829 = vcmp.lt.s32.totalorder %v823, 15
        %vm830 = vcmp.lt.s32.totalorder %v824, 15
        %vm831 = vmand %vm827, %vm829
        %vm832 = vmand %vm828, %vm830
        %vm833 = vcmp.gt.s32.totalorder %v826, 0
        %vm834 = vmand %vm831, %vm833
        %vm835 = vmand %vm832, %vm833
        %vm836 = vcmp.lt.s32.totalorder %v826, 15
        %vm837 = vmand %vm834, %vm836
        %vm838 = vmand %vm835, %vm836
        %v839 = vrot.slane %v816, 7
        %v840 = vrot.slane %v817, 7
        %v841 = vrot.slane %v818, 7
        %v842 = vrot.slane %v819, 7
        %v843 = vrot.slane %v820, 7
        %v844 = vrot.slane %v821, 7
        %vm845 = vcmp.lt.s32.totalorder %v823, 1
        %v846 = vsel %vm845, %v843, %v844
        %v847 = vsel %vm845, %v842, %v843
        %v848 = vsel %vm845, %v841, %v842
        %v849 = vsel %vm845, %v840, %v841
        %v850 = vsel %vm845, %v839, %v840
        %v851 = vsel %vm845, %v844, %v839
        %v852 = vadd.f32 %v816, %v851
        %v853 = vadd.f32 %v817, %v850
        %v854 = vadd.f32 %v818, %v849
        %v855 = vadd.f32 %v819, %v848
        %v856 = vadd.f32 %v820, %v847
        %v857 = vadd.f32 %v821, %v846
        %v858 = vrot.slane %v816, 1
        %v859 = vrot.slane %v817, 1
        %v860 = vrot.slane %v818, 1
        %v861 = vrot.slane %v819, 1
        %v862 = vrot.slane %v820, 1
        %v863 = vrot.slane %v821, 1
        %vm864 = vcmp.lt.s32.totalorder %v823, 7
        %v865 = vsel %vm864, %v862, %v863
        %v866 = vsel %vm864, %v861, %v862
        %v867 = vsel %vm864, %v860, %v861
        %v868 = vsel %vm864, %v859, %v860
        %v869 = vsel %vm864, %v858, %v859
        %v870 = vsel %vm864, %v863, %v858
        %v871 = vadd.f32 %v852, %v869
        %v872 = vadd.f32 %v853, %v868
        %v873 = vadd.f32 %v854, %v867
        %v874 = vadd.f32 %v855, %v866
        %v875 = vadd.f32 %v856, %v865
        %v876 = vadd.f32 %v857, %v870
        %vm877 = vcmask 1047680
        %878 = vrot.lane.b32.xlu0 %v871, 16
        %v879 = vpop.permute.xlu0 %878
        %v880 = vsel %vm877, %v879, %v871
        %881 = vrot.lane.b32.xlu0 %v872, 16
        %v882 = vpop.permute.xlu0 %881
        %v883 = vsel %vm877, %v882, %v872
        %884 = vrot.lane.b32.xlu0 %v873, 16
        %v885 = vpop.permute.xlu0 %884
        %v886 = vsel %vm877, %v885, %v873
        %887 = vrot.lane.b32.xlu0 %v874, 16
        %v888 = vpop.permute.xlu0 %887
        %v889 = vsel %vm877, %v888, %v874
        %890 = vrot.lane.b32.xlu0 %v875, 16
        %v891 = vpop.permute.xlu0 %890
        %v892 = vsel %vm877, %v891, %v875
        %893 = vrot.lane.b32.xlu0 %v876, 16
        %v894 = vpop.permute.xlu0 %893
        %v895 = vsel %vm877, %v894, %v876
        %896 = vrot.lane.b32.xlu0 %v880, 16
        %v897 = vpop.permute.xlu0 %896
        %898 = vrot.lane.b32.xlu0 %v883, 16
        %v899 = vpop.permute.xlu0 %898
        %900 = vrot.lane.b32.xlu0 %v886, 16
        %v901 = vpop.permute.xlu0 %900
        %902 = vrot.lane.b32.xlu0 %v889, 16
        %v903 = vpop.permute.xlu0 %902
        %904 = vrot.lane.b32.xlu0 %v892, 16
        %v905 = vpop.permute.xlu0 %904
        %906 = vrot.lane.b32.xlu0 %v895, 16
        %v907 = vpop.permute.xlu0 %906
        %v908 = vsel %vm877, %v897, %v871
        %v909 = vsel %vm877, %v899, %v872
        %v910 = vsel %vm877, %v901, %v873
        %v911 = vsel %vm877, %v903, %v874
        %v912 = vsel %vm877, %v905, %v875
        %v913 = vsel %vm877, %v907, %v876
        %920 = vrot.lane.b32.xlu0 %v908, 113
        %v921 = vpop.permute.xlu0 %920
        %922 = vrot.lane.b32.xlu0 %v909, 113
        %v923 = vpop.permute.xlu0 %922
        %924 = vrot.lane.b32.xlu0 %v910, 113
        %v925 = vpop.permute.xlu0 %924
        %926 = vrot.lane.b32.xlu0 %v911, 113
        %v927 = vpop.permute.xlu0 %926
        %928 = vrot.lane.b32.xlu0 %v912, 113
        %v929 = vpop.permute.xlu0 %928
        %930 = vrot.lane.b32.xlu0 %v913, 113
        %v931 = vpop.permute.xlu0 %930
        %v938 = vadd.f32 %v871, %v921
        %v939 = vadd.f32 %v872, %v923
        %v940 = vadd.f32 %v873, %v925
        %v941 = vadd.f32 %v874, %v927
        %v942 = vadd.f32 %v875, %v929
        %v943 = vadd.f32 %v876, %v931
        %944 = vrot.lane.b32.xlu0 %v908, 127
        %v945 = vpop.permute.xlu0 %944
        %946 = vrot.lane.b32.xlu0 %v909, 127
        %v947 = vpop.permute.xlu0 %946
        %948 = vrot.lane.b32.xlu0 %v910, 127
        %v949 = vpop.permute.xlu0 %948
        %950 = vrot.lane.b32.xlu0 %v911, 127
        %v951 = vpop.permute.xlu0 %950
        %952 = vrot.lane.b32.xlu0 %v912, 127
        %v953 = vpop.permute.xlu0 %952
        %954 = vrot.lane.b32.xlu0 %v913, 127
        %v955 = vpop.permute.xlu0 %954
        %v962 = vadd.f32 %v938, %v945
        %v963 = vadd.f32 %v939, %v947
        %v964 = vadd.f32 %v940, %v949
        %v965 = vadd.f32 %v941, %v951
        %v966 = vadd.f32 %v942, %v953
        %v967 = vadd.f32 %v943, %v955
        %v968 = vmul.f32 %v816, 4.0
        %v969 = vmul.f32 %v817, 4.0
        %v970 = vmul.f32 %v818, 4.0
        %v971 = vmul.f32 %v819, 4.0
        %v972 = vmul.f32 %v820, 4.0
        %v973 = vmul.f32 %v821, 4.0
        %v974 = vadd.f32 %v962, %v968
        %v975 = vadd.f32 %v963, %v969
        %v976 = vadd.f32 %v964, %v970
        %v977 = vadd.f32 %v965, %v971
        %v978 = vadd.f32 %v966, %v972
        %v979 = vadd.f32 %v967, %v973
        %v980 = vmul.f32 %v974, 0.07692308
        %v981 = vmul.f32 %v975, 0.07692308
        %v982 = vmul.f32 %v976, 0.07692308
        %v983 = vmul.f32 %v977, 0.07692308
        %v984 = vmul.f32 %v978, 0.07692308
        %v985 = vmul.f32 %v979, 0.07692308
        %v986 = vmul.f32 %v816, 2.0
        %v987 = vmul.f32 %v817, 2.0
        %v988 = vmul.f32 %v818, 2.0
        %v989 = vmul.f32 %v819, 2.0
        %v990 = vmul.f32 %v820, 2.0
        %v991 = vmul.f32 %v821, 2.0
        %v992 = vsub.f32 %v986, %v980
        %v993 = vsub.f32 %v987, %v981
        %v994 = vsub.f32 %v988, %v982
        %v995 = vsub.f32 %v989, %v983
        %v996 = vsub.f32 %v990, %v984
        %v997 = vsub.f32 %v991, %v985
        %v998 = vmax.f32 %v992, 0.0
        %v999 = vmax.f32 %v993, 0.0
        %v1000 = vmax.f32 %v994, 0.0
        %v1001 = vmax.f32 %v995, 0.0
        %v1002 = vmax.f32 %v996, 0.0
        %v1003 = vmax.f32 %v997, 0.0
        %v1004 = vmin.f32 %v998, 1.0
        %v1005 = vmin.f32 %v999, 1.0
        %v1006 = vmin.f32 %v1000, 1.0
        %v1007 = vmin.f32 %v1001, 1.0
        %v1008 = vmin.f32 %v1002, 1.0
        %v1009 = vmin.f32 %v1003, 1.0
        %v1010 = vsel %vm837, %v1004, %v816
        %v1011 = vsel %vm838, %v1005, %v817
        %v1012 = vsel %vm837, %v1006, %v818
        %v1013 = vsel %vm838, %v1007, %v819
        %v1014 = vsel %vm837, %v1008, %v820
        %v1015 = vsel %vm838, %v1009, %v821
        %v1016 = vsel %vm340, %v1010, inf
        %1017 = vmin.xlane.f32.xlu0 %v1016
        %v1018 = vpop.xlane.xlu0 %1017
        %v1019 = vsel %vm340, %v1011, inf
        %1020 = vmin.xlane.f32.xlu0 %v1019
        %v1021 = vpop.xlane.xlu0 %1020
        %v1022 = vsel %vm340, %v1012, inf
        %1023 = vmin.xlane.f32.xlu0 %v1022
        %v1024 = vpop.xlane.xlu0 %1023
        %v1025 = vsel %vm340, %v1013, inf
        %1026 = vmin.xlane.f32.xlu0 %v1025
        %v1027 = vpop.xlane.xlu0 %1026
        %v1028 = vsel %vm340, %v1014, inf
        %1029 = vmin.xlane.f32.xlu0 %v1028
        %v1030 = vpop.xlane.xlu0 %1029
        %v1031 = vsel %vm340, %v1015, inf
        %1032 = vmin.xlane.f32.xlu0 %v1031
        %v1033 = vpop.xlane.xlu0 %1032
        %v1034 = vmin.f32 %v1018, %v1021
        %v1035 = vrot.slane %v1034, 4
        %v1036 = vmin.f32 %v1034, %v1035
        %v1037 = vrot.slane %v1036, 2
        %v1038 = vmin.f32 %v1036, %v1037
        %v1039 = vrot.slane %v1038, 1
        %v1040 = vmin.f32 %v1038, %v1039
        %v1041 = vmin.f32 %v1024, %v1027
        %v1042 = vrot.slane %v1041, 4
        %v1043 = vmin.f32 %v1041, %v1042
        %v1044 = vrot.slane %v1043, 2
        %v1045 = vmin.f32 %v1043, %v1044
        %v1046 = vrot.slane %v1045, 1
        %v1047 = vmin.f32 %v1045, %v1046
        %v1048 = vmin.f32 %v1030, %v1033
        %v1049 = vrot.slane %v1048, 4
        %v1050 = vmin.f32 %v1048, %v1049
        %v1051 = vrot.slane %v1050, 2
        %v1052 = vmin.f32 %v1050, %v1051
        %v1053 = vrot.slane %v1052, 1
        %v1054 = vmin.f32 %v1052, %v1053
        %v1055 = vsel %vm340, %v1010, -inf
        %1056 = vmax.xlane.f32.xlu0 %v1055
        %v1057 = vpop.xlane.xlu0 %1056
        %v1058 = vsel %vm340, %v1011, -inf
        %1059 = vmax.xlane.f32.xlu0 %v1058
        %v1060 = vpop.xlane.xlu0 %1059
        %v1061 = vsel %vm340, %v1012, -inf
        %1062 = vmax.xlane.f32.xlu0 %v1061
        %v1063 = vpop.xlane.xlu0 %1062
        %v1064 = vsel %vm340, %v1013, -inf
        %1065 = vmax.xlane.f32.xlu0 %v1064
        %v1066 = vpop.xlane.xlu0 %1065
        %v1067 = vsel %vm340, %v1014, -inf
        %1068 = vmax.xlane.f32.xlu0 %v1067
        %v1069 = vpop.xlane.xlu0 %1068
        %v1070 = vsel %vm340, %v1015, -inf
        %1071 = vmax.xlane.f32.xlu0 %v1070
        %v1072 = vpop.xlane.xlu0 %1071
        %v1073 = vmax.f32 %v1057, %v1060
        %v1074 = vrot.slane %v1073, 4
        %v1075 = vmax.f32 %v1073, %v1074
        %v1076 = vrot.slane %v1075, 2
        %v1077 = vmax.f32 %v1075, %v1076
        %v1078 = vrot.slane %v1077, 1
        %v1079 = vmax.f32 %v1077, %v1078
        %v1080 = vmax.f32 %v1063, %v1066
        %v1081 = vrot.slane %v1080, 4
        %v1082 = vmax.f32 %v1080, %v1081
        %v1083 = vrot.slane %v1082, 2
        %v1084 = vmax.f32 %v1082, %v1083
        %v1085 = vrot.slane %v1084, 1
        %v1086 = vmax.f32 %v1084, %v1085
        %v1087 = vmax.f32 %v1069, %v1072
        %v1088 = vrot.slane %v1087, 4
        %v1089 = vmax.f32 %v1087, %v1088
        %v1090 = vrot.slane %v1089, 2
        %v1091 = vmax.f32 %v1089, %v1090
        %v1092 = vrot.slane %v1091, 1
        %v1093 = vmax.f32 %v1091, %v1092
        %v1094 = vsub.f32 %v1079, %v1040
        %v1095 = vsub.f32 %v1086, %v1047
        %v1096 = vsub.f32 %v1093, %v1054
        %v1097 = vmax.f32 %v1094, 1e-12
        %v1098 = vmax.f32 %v1095, 1e-12
        %v1099 = vmax.f32 %v1096, 1e-12
        %v1100 = vrcp.pop %v1097
        %v1101 = vrcp.pop %v1098
        %v1102 = vrcp.pop %v1099
        %vm1103 = vcmp.gt.f32.partialorder %v1079, %v1040
        %vm1104 = vcmp.gt.f32.partialorder %v1086, %v1047
        %vm1105 = vcmp.gt.f32.partialorder %v1093, %v1054
        %v1106 = vsub.f32 %v1010, %v1040
        %v1107 = vsub.f32 %v1011, %v1040
        %v1108 = vsub.f32 %v1012, %v1047
        %v1109 = vsub.f32 %v1013, %v1047
        %v1110 = vsub.f32 %v1014, %v1054
        %v1111 = vsub.f32 %v1015, %v1054
        %v1112 = vmul.f32 %v1106, %v1100
        %v1113 = vmul.f32 %v1107, %v1100
        %v1114 = vmul.f32 %v1108, %v1101
        %v1115 = vmul.f32 %v1109, %v1101
        %v1116 = vmul.f32 %v1110, %v1102
        %v1117 = vmul.f32 %v1111, %v1102
        %v1118 = vmax.f32 %v1112, 0.0
        %v1119 = vmax.f32 %v1113, 0.0
        %v1120 = vmax.f32 %v1114, 0.0
        %v1121 = vmax.f32 %v1115, 0.0
        %v1122 = vmax.f32 %v1116, 0.0
        %v1123 = vmax.f32 %v1117, 0.0
        %v1124 = vmin.f32 %v1118, 1.0
        %v1125 = vmin.f32 %v1119, 1.0
        %v1126 = vmin.f32 %v1120, 1.0
        %v1127 = vmin.f32 %v1121, 1.0
        %v1128 = vmin.f32 %v1122, 1.0
        %v1129 = vmin.f32 %v1123, 1.0
        %v1130 = vsel %vm1103, 1, 0
        %v1131 = vsel %vm1104, 1, 0
        %v1132 = vsel %vm1105, 1, 0
        %vm1133 = vcmp.eq.s32.totalorder %v1130, 1
        %vm1134 = vcmp.eq.s32.totalorder %v1131, 1
        %vm1135 = vcmp.eq.s32.totalorder %v1132, 1
        %v1136 = vsel %vm1133, %v1124, %v1010
        %v1137 = vsel %vm1133, %v1125, %v1011
        %v1138 = vsel %vm1134, %v1126, %v1012
        %v1139 = vsel %vm1134, %v1127, %v1013
        %v1140 = vsel %vm1135, %v1128, %v1014
        %v1141 = vsel %vm1135, %v1129, %v1015
        %1142 = vst.msk [vmem:[%s301] sm:$0xff] %vm340, %v1136
        %1143 = vst.msk [vmem:[%s301 + $0x8] sm:$0xff] %vm340, %v1137
        %1144 = vst.msk [vmem:[%s301 + $0x10] sm:$0xff] %vm340, %v1138
        %1145 = vst.msk [vmem:[%s301 + $0x18] sm:$0xff] %vm340, %v1139
        %1146 = vst.msk [vmem:[%s301 + $0x20] sm:$0xff] %vm340, %v1140
        %1147 = vst.msk [vmem:[%s301 + $0x28] sm:$0xff] %vm340, %v1141
        %s1148 = sand.u32 %s142, 1
        %s1149 = scalar_lea.sflag [#allocation4], %s1148
        %s1150 = sand.u32 %s142, 1
        %s1151 = smul.addr %s1150, 48
        %s1152 = scalar_lea.vmem [#allocation11], %s1151
        // Predicated region
        $region61: #{tpu_custom_call.1} parent=39 // pred_check
          %p1153 = pneg %p152
        $region62: #{tpu_custom_call.1} parent=39 // pred_check_branch
          %1155 = sbr.rel (%p1153) target = $region64
        $region63: #{tpu_custom_call.1} parent=39 // pred_region
          %s1156 = smul.u32 3, %s24
          %s1158 = ssub.s32 768, 768
          %1159 = vsyncadd %s1149, %s1158
          %s1160 = smul.addr %s1156, 2
          %s1161 = smul.addr %s1160, 128
          %s1162 = scalar_lea.hbm %s5, %s1161
          %s1163 = sshll.u32 %s1152, 4
          %s1164 = int_to_ptr.vmem [resolvable:$true] %s1163
          %1169 = dma.vmem_to_hbm [thread:$0]  %s1164, 768, %s1162, %s1149, 128, 128, 8
        $region64: #{tpu_custom_call.1} parent=39 // pred_fallthru
          _
      $region40: #{tpu_custom_call.1} parent=5 // pred_fallthru
        _
      %p1170 = scmp.le.s32.totalorder 2, %s19
      // Predicated region
      $region65: #{tpu_custom_call.1} parent=5 // pred_check
        %p1171 = pneg %p1170
      $region66: #{tpu_custom_call.1} parent=5 // pred_check_branch
        %1173 = sbr.rel (%p1171) target = $region68
      $region67: #{tpu_custom_call.1} parent=5 // pred_region
        %s1174 = ssub.s32 %s19, 2
        // Predicated region
        $region69: #{tpu_custom_call.1} parent=67 // pred_check
          %p1175 = pneg %p158
        $region70: #{tpu_custom_call.1} parent=67 // pred_check_branch
          %1177 = sbr.rel (%p1175) target = $region72
        $region71: #{tpu_custom_call.1} parent=67 // pred_region
          %s1178 = sand.u32 %s143, 1
          %s1179 = scalar_lea.sflag [#allocation4], %s1178
          %s1180 = sand.u32 %s143, 1
          %s1181 = smul.addr %s1180, 48
          %s1182 = scalar_lea.vmem [#allocation11], %s1181
          %1183 = dma.done %s1179, 768
        $region72: #{tpu_custom_call.1} parent=67 // pred_fallthru
          _
      $region68: #{tpu_custom_call.1} parent=5 // pred_fallthru
        _
    $region6: #{tpu_custom_call.1} parent=1 // loop_footer
      %s23 = sadd.s32 1, %s19
    $region7: #{tpu_custom_call.1} parent=1 // loop_footer_branch
      %18 = sbr.rel target = $region3
    $region8: #{tpu_custom_call.1} parent=1 // loop_exit
      _
    %1184 = vsyncpa [#allocation3], 1
    %s1185 = scalar_lea.sflag [#allocation3], 1
    %1186 = vsyncpa %s1185, 1
    %1187 = vsyncpa [#allocation6], 1
    %1188 = vsyncpa [#allocation9], 1
    %1189 = vsyncpa [#allocation4], 1
    %s1190 = scalar_lea.sflag [#allocation4], 1
    %1191 = vsyncpa %s1190, 1

</llo_original>
